<compile_context>
chip_gen: v7x
topology: tpu7x:2x2x1
jax: 0.10.0
libtpu: 0.0.40
codegen_flags: <defaults>
</compile_context>

<pallas_src>
import math
import functools

import jax
import jax.numpy as jnp
from jax.experimental import pallas as pl
from jax.experimental.pallas import tpu as pltpu


BBLK = 8             # batch rows per grid step (fills the 8 sublanes); raise on v6e
MAX_SEQ_CHUNK = 512  # keys per seq-chunk (multiple of 128) once S exceeds it
NEG_BIG = -1e9       # mask fill value
NEG_INIT = -1e30     # online-softmax running-max init (finite -> no inf-inf)

_PARAM_ORDER = ("ln1_g", "ln1_b", "wq", "bq", "wk_t", "wv", "bv", "wo", "bo",
                "ln2_g", "ln2_b", "w1", "b1", "w2", "b2", "ws", "bs")


# ----------------------------- Pallas kernel --------------------------------

def reward_kernel(h_real,
                  x_ref, xlast_ref, mask_ref,
                  ln1_g, ln1_b, wq, bq, wk_t, wv, bv, wo, bo,
                  ln2_g, ln2_b, w1, b1, w2, b2, ws, bs,
                  out_ref,
                  qk_sc, m_sc, l_sc, acc_sc):
    """Grid = (batch_block "parallel", seq_chunk "arbitrary").

    x_ref     : [BBLK, SC, Hp] bf16   embedded tokens for this seq chunk
    xlast_ref : [BBLK, Hp]     bf16   embedded last-position tokens
    mask_ref  : [BBLK, SC]     f32    attention (padding) mask for this chunk
    out_ref   : [1, BBLK, 1]   f32    reward scores (written on the last chunk)
    scratch   : qk_sc/acc_sc [BBLK,Hp] f32, m_sc/l_sc [BBLK,1] f32
    """
    bblk, sc_len, Hp = x_ref.shape
    inv_h = 1.0 / float(h_real)
    scale = 1.0 / math.sqrt(float(h_real))
    f32, bf16 = jnp.float32, jnp.bfloat16

    def layer_norm(v, g_ref, b_ref):
        # E[x^2]-mu^2 with the REAL hidden size as divisor: zero-padded lanes
        # contribute nothing and zero-padded gamma/beta keep them at 0.
        mu = jnp.sum(v, axis=-1, keepdims=True) * inv_h
        ex2 = jnp.sum(v * v, axis=-1, keepdims=True) * inv_h
        var = ex2 - mu * mu
        return (v - mu) * jax.lax.rsqrt(var + 1e-5) * g_ref[...] + b_ref[...]

    sc = pl.program_id(1)

    # ---- chunk 0: build the folded query, reset the online-softmax state ----
    @pl.when(sc == 0)
    def _init():
        h_last = layer_norm(xlast_ref[...].astype(f32), ln1_g, ln1_b)
        q = jnp.dot(h_last.astype(bf16), wq[...], preferred_element_type=f32) + bq[...]
        # Fold Wk (and the 1/sqrt(H) scale) into the query.  The q.bk term is a
        # per-row constant which softmax cancels, so it is dropped exactly.
        qk_sc[...] = jnp.dot(q.astype(bf16), wk_t[...],
                             preferred_element_type=f32) * scale
        m_sc[...] = jnp.full(m_sc.shape, NEG_INIT, f32)
        l_sc[...] = jnp.zeros(l_sc.shape, f32)
        acc_sc[...] = jnp.zeros(acc_sc.shape, f32)

    # ---- every chunk: online softmax over this chunk's keys.  Only the last
    # query is scored, so causality is automatic (row S-1 attends everywhere)
    # and only the padding mask remains.
    h3 = layer_norm(x_ref[...].astype(f32), ln1_g, ln1_b).astype(bf16)    # [b,SC,Hp]
    logits = jnp.einsum("bqd,bkd->bqk",
                        qk_sc[...].astype(bf16)[:, None, :], h3,
                        preferred_element_type=f32)[:, 0, :]              # [b,SC]
    logits = jnp.where(mask_ref[...] > 0.5, logits, NEG_BIG)

    m_prev = m_sc[...]
    m_new = jnp.maximum(m_prev, jnp.max(logits, axis=-1, keepdims=True))
    alpha = jnp.exp(m_prev - m_new)
    p = jnp.exp(logits - m_new)                                           # [b,SC]
    l_sc[...] = alpha * l_sc[...] + jnp.sum(p, axis=-1, keepdims=True)
    pv = jnp.einsum("bqk,bkd->bqd",
                    p.astype(bf16)[:, None, :], h3,
                    preferred_element_type=f32)[:, 0, :]                  # [b,Hp]
    acc_sc[...] = alpha * acc_sc[...] + pv
    m_sc[...] = m_new

    # ---- last chunk: V/O projections, MLP and scoring head (last token only).
    @pl.when(sc == pl.num_programs(1) - 1)
    def _finalize():
        inv_l = pl.reciprocal(l_sc[...], approx=True)
        wh = acc_sc[...] * inv_l                              # sum_s p_s LN(x_s)
        ctx = jnp.dot(wh.astype(bf16), wv[...], preferred_element_type=f32) + bv[...]
        attn = jnp.dot(ctx.astype(bf16), wo[...], preferred_element_type=f32) + bo[...]
        x1 = xlast_ref[...].astype(f32) + attn                # residual 1

        h2 = layer_norm(x1, ln2_g, ln2_b).astype(bf16)
        f = jnp.dot(h2, w1[...], preferred_element_type=f32) + b1[...]
        f = jax.nn.gelu(f, approximate=True).astype(bf16)
        f = jnp.dot(f, w2[...], preferred_element_type=f32) + b2[...]
        x2 = x1 + f                                           # last_hidden[:, -1, :]

        # scoring head: VPU multiply + lane reduce (ws stored as a [1,Hp] row)
        score = jnp.sum(x2 * ws[...], axis=-1, keepdims=True) + bs[...]   # [b,1]
        out_ref[...] = score[None]


# ------------------------------- wrapper -------------------------------------

def _const_spec(shape):
    nd = len(shape)
    # Grid-invariant index_map: the block is DMA'd once and reused across steps.
    return pl.BlockSpec(shape, lambda bb, sc, _nd=nd: (0,) * _nd)


@functools.partial(jax.jit, static_argnames=("h_real",))
def reasoning_reward_forward(prepped, input_ids, attention_mask, *, h_real):
    """Returns scores of shape [B] (matches the PyTorch .squeeze(-1))."""
    B, S = input_ids.shape
    Hp = prepped["embed"].shape[1]

    # Glue: embedding gather stays in plain XLA but streams bf16.
    # TODO(synk): fuse the gather into the kernel (scalar-prefetched ids + DMA
    # gather from an HBM-resident table) to drop this HBM round trip.
    x_emb = jnp.take(prepped["embed"], input_ids, axis=0)        # [B, S, Hp] bf16
    x_last = x_emb[:, S - 1, :]                                  # [B, Hp]    bf16
    mask = attention_mask.astype(jnp.float32)                    # [B, S]

    # Pad batch to a multiple of BBLK (padded rows are sliced off at the end).
    nblk = pl.cdiv(B, BBLK)
    Bp = nblk * BBLK
    if Bp != B:
        x_emb = jnp.pad(x_emb, ((0, Bp - B), (0, 0), (0, 0)))
        x_last = jnp.pad(x_last, ((0, Bp - B), (0, 0)))
        mask = jnp.pad(mask, ((0, Bp - B), (0, 0)))

    # Tile the sequence: bounded per-step VMEM, online softmax across chunks.
    SC = S if S <= MAX_SEQ_CHUNK else MAX_SEQ_CHUNK
    nsc = pl.cdiv(S, SC)
    Sp = nsc * SC
    if Sp != S:
        x_emb = jnp.pad(x_emb, ((0, 0), (0, Sp - S), (0, 0)))    # zero tokens,
        mask = jnp.pad(mask, ((0, 0), (0, Sp - S)))              # mask = 0

    in_specs = [
        pl.BlockSpec((BBLK, SC, Hp), lambda bb, sc: (bb, sc, 0)),   # x chunk (bf16)
        pl.BlockSpec((BBLK, Hp), lambda bb, sc: (bb, 0)),           # last-token x
        pl.BlockSpec((BBLK, SC), lambda bb, sc: (bb, sc)),          # padding mask
    ] + [_const_spec(prepped[name].shape) for name in _PARAM_ORDER]

    # Explicit VMEM budget (pipeline double-buffers the streamed inputs).
    wbytes = sum(int(math.prod(prepped[n].shape)) * prepped[n].dtype.itemsize
                 for n in _PARAM_ORDER)
    abytes = BBLK * SC * Hp * 2 + BBLK * Hp * 2 + BBLK * SC * 4 + BBLK * 4
    sbytes = 2 * BBLK * Hp * 4 + 2 * BBLK * 4
    vmem_limit = int(min(max(2 * (2 * abytes + 2 * wbytes + sbytes), 32 << 20),
                         64 << 20))

    out = pl.pallas_call(
        functools.partial(reward_kernel, h_real),
        out_shape=jax.ShapeDtypeStruct((nblk, BBLK, 1), jnp.float32),
        grid=(nblk, nsc),
        in_specs=in_specs,
        out_specs=pl.BlockSpec((1, BBLK, 1), lambda bb, sc: (bb, 0, 0)),
        scratch_shapes=[
            pltpu.VMEM((BBLK, Hp), jnp.float32),   # folded query  q @ Wk^T * scale
            pltpu.VMEM((BBLK, 1), jnp.float32),    # running max
            pltpu.VMEM((BBLK, 1), jnp.float32),    # running denom
            pltpu.VMEM((BBLK, Hp), jnp.float32),   # running sum_s p_s LN(x_s)
        ],
        compiler_params=pltpu.CompilerParams(
            dimension_semantics=("parallel", "arbitrary"),
            vmem_limit_bytes=vmem_limit),
    )(x_emb, x_last, mask, *[prepped[name] for name in _PARAM_ORDER])

    return out.reshape(Bp)[:B]


# --------------------------- parameter preparation ----------------------------

def prepare_params(params, lane=128):
    """Zero-pad hidden/FFN dims to lane multiples, pre-transpose Wk, and cast
    the streamed/matmul tensors to bf16 (LayerNorm params & biases stay f32)."""
    H = params["wq"].shape[0]
    F = params["w1"].shape[1]
    Hp = -(-H // lane) * lane
    Fp = -(-F // lane) * lane
    ph, pf = Hp - H, Fp - F
    f32, bf16 = jnp.float32, jnp.bfloat16

    def pad_last(a, n):
        return jnp.pad(a, ((0, 0),) * (a.ndim - 1) + ((0, n),))

    return {
        "embed": pad_last(params["embed"], ph).astype(bf16),               # [V, Hp]
        "ln1_g": pad_last(params["ln1_g"], ph).astype(f32),
        "ln1_b": pad_last(params["ln1_b"], ph).astype(f32),
        "wq": jnp.pad(params["wq"], ((0, ph), (0, ph))).astype(bf16),
        "bq": pad_last(params["bq"], ph).astype(f32),
        # Wk pre-transposed so the kernel folds it into the query; bk is dropped
        # exactly (q . bk is a per-row constant that softmax cancels).
        "wk_t": jnp.pad(params["wk"].T, ((0, ph), (0, ph))).astype(bf16),
        "wv": jnp.pad(params["wv"], ((0, ph), (0, ph))).astype(bf16),
        "bv": pad_last(params["bv"], ph).astype(f32),
        "wo": jnp.pad(params["wo"], ((0, ph), (0, ph))).astype(bf16),
        "bo": pad_last(params["bo"], ph).astype(f32),
        "ln2_g": pad_last(params["ln2_g"], ph).astype(f32),
        "ln2_b": pad_last(params["ln2_b"], ph).astype(f32),
        "w1": jnp.pad(params["w1"], ((0, ph), (0, pf))).astype(bf16),      # [Hp, Fp]
        "b1": pad_last(params["b1"], pf).astype(f32),
        "w2": jnp.pad(params["w2"], ((0, pf), (0, ph))).astype(bf16),      # [Fp, Hp]
        "b2": pad_last(params["b2"], ph).astype(f32),
        "ws": pad_last(params["ws"].T, ph).astype(f32),                    # [1, Hp]
        "bs": params["bs"].astype(f32),                                    # [1, 1]
    }


# --------------------------- deterministic params -----------------------------

def init_params(key, vocab, hidden, ffn):
    ks = jax.random.split(key, 8)
    s = 0.02
    return {
        "embed": s * jax.random.normal(ks[0], (vocab, hidden), jnp.float32),
        "ln1_g": jnp.ones((1, hidden), jnp.float32),
        "ln1_b": jnp.zeros((1, hidden), jnp.float32),
        "wq": s * jax.random.normal(ks[1], (hidden, hidden), jnp.float32),
        "bq": jnp.zeros((1, hidden), jnp.float32),
        "wk": s * jax.random.normal(ks[2], (hidden, hidden), jnp.float32),
        "bk": jnp.zeros((1, hidden), jnp.float32),   # folded out (softmax-invariant)
        "wv": s * jax.random.normal(ks[3], (hidden, hidden), jnp.float32),
        "bv": jnp.zeros((1, hidden), jnp.float32),
        "wo": s * jax.random.normal(ks[4], (hidden, hidden), jnp.float32),
        "bo": jnp.zeros((1, hidden), jnp.float32),
        "ln2_g": jnp.ones((1, hidden), jnp.float32),
        "ln2_b": jnp.zeros((1, hidden), jnp.float32),
        "w1": s * jax.random.normal(ks[5], (hidden, ffn), jnp.float32),
        "b1": jnp.zeros((1, ffn), jnp.float32),
        "w2": s * jax.random.normal(ks[6], (ffn, hidden), jnp.float32),
        "b2": jnp.zeros((1, hidden), jnp.float32),
        # scoring_head = nn.Linear(hidden_size, 1)
        "ws": s * jax.random.normal(ks[7], (hidden, 1), jnp.float32),
        "bs": jnp.zeros((1, 1), jnp.float32),
    }


# ---------------------------------- main --------------------------------------

if __name__ == "__main__":
    # TODO(synk): the HF PreTrainedModel backbone and tokenizer are external;
    # they are replaced by a deterministic synthetic 1-block causal transformer.
    B, S, H, V, F = 2, 8, 32, 64, 128

    key = jax.random.PRNGKey(0)
    pkey, ikey = jax.random.split(key)
    params = init_params(pkey, V, H, F)
    prepped = prepare_params(params, lane=128)

    input_ids = jax.random.randint(ikey, (B, S), 0, V, dtype=jnp.int32)
    attention_mask = jnp.array([[1, 1, 1, 1, 1, 1, 0, 0],
                                [1, 1, 1, 1, 1, 1, 1, 1]], dtype=jnp.int32)

    scores = reasoning_reward_forward(prepped, input_ids, attention_mask, h_real=H)
    jax.block_until_ready(scores)
    assert scores.shape == (B,) and scores.dtype == jnp.float32
    assert bool(jnp.all(jnp.isfinite(scores)))
    print("KERNEL_OK")
</pallas_src>

<mosaic_0001>
module attributes {stable_mosaic.version = 11 : i64} {
  func.func @reward_kernel(%arg0: i32, %arg1: i32, %arg2: memref<8x8x128xbf16, #tpu.memory_space<vmem>>, %arg3: memref<8x128xbf16, #tpu.memory_space<vmem>>, %arg4: memref<8x8xf32, #tpu.memory_space<vmem>>, %arg5: memref<1x128xf32, #tpu.memory_space<vmem>>, %arg6: memref<1x128xf32, #tpu.memory_space<vmem>>, %arg7: memref<128x128xbf16, #tpu.memory_space<vmem>>, %arg8: memref<1x128xf32, #tpu.memory_space<vmem>>, %arg9: memref<128x128xbf16, #tpu.memory_space<vmem>>, %arg10: memref<128x128xbf16, #tpu.memory_space<vmem>>, %arg11: memref<1x128xf32, #tpu.memory_space<vmem>>, %arg12: memref<128x128xbf16, #tpu.memory_space<vmem>>, %arg13: memref<1x128xf32, #tpu.memory_space<vmem>>, %arg14: memref<1x128xf32, #tpu.memory_space<vmem>>, %arg15: memref<1x128xf32, #tpu.memory_space<vmem>>, %arg16: memref<128x128xbf16, #tpu.memory_space<vmem>>, %arg17: memref<1x128xf32, #tpu.memory_space<vmem>>, %arg18: memref<128x128xbf16, #tpu.memory_space<vmem>>, %arg19: memref<1x128xf32, #tpu.memory_space<vmem>>, %arg20: memref<1x128xf32, #tpu.memory_space<vmem>>, %arg21: memref<1x1xf32, #tpu.memory_space<vmem>>, %arg22: memref<1x8x1xf32, #tpu.memory_space<vmem>>, %arg23: memref<8x128xf32, #tpu.memory_space<vmem>>, %arg24: memref<8x1xf32, #tpu.memory_space<vmem>>, %arg25: memref<8x1xf32, #tpu.memory_space<vmem>>, %arg26: memref<8x128xf32, #tpu.memory_space<vmem>>) attributes {dimension_semantics = [#tpu.dimension_semantics<parallel>, #tpu.dimension_semantics<arbitrary>], iteration_bounds = array<i64: 1, 1>, scalar_prefetch = 0 : i64, scratch_operands = 4 : i64, tpu.core_type = #tpu.core_type<tc>, window_params = [{transform_indices = @transform_0, window_bounds = array<i64: 8, 8, 128>}, {transform_indices = @transform_1, window_bounds = array<i64: 8, 128>}, {transform_indices = @transform_2, window_bounds = array<i64: 8, 8>}, {pipeline_mode = #tpu.pipeline_mode<synchronous>, transform_indices = @transform_3, window_bounds = array<i64: 1, 128>}, {pipeline_mode = #tpu.pipeline_mode<synchronous>, transform_indices = @transform_4, window_bounds = array<i64: 1, 128>}, {pipeline_mode = #tpu.pipeline_mode<synchronous>, transform_indices = @transform_5, window_bounds = array<i64: 128, 128>}, {pipeline_mode = #tpu.pipeline_mode<synchronous>, transform_indices = @transform_6, window_bounds = array<i64: 1, 128>}, {pipeline_mode = #tpu.pipeline_mode<synchronous>, transform_indices = @transform_7, window_bounds = array<i64: 128, 128>}, {pipeline_mode = #tpu.pipeline_mode<synchronous>, transform_indices = @transform_8, window_bounds = array<i64: 128, 128>}, {pipeline_mode = #tpu.pipeline_mode<synchronous>, transform_indices = @transform_9, window_bounds = array<i64: 1, 128>}, {pipeline_mode = #tpu.pipeline_mode<synchronous>, transform_indices = @transform_10, window_bounds = array<i64: 128, 128>}, {pipeline_mode = #tpu.pipeline_mode<synchronous>, transform_indices = @transform_11, window_bounds = array<i64: 1, 128>}, {pipeline_mode = #tpu.pipeline_mode<synchronous>, transform_indices = @transform_12, window_bounds = array<i64: 1, 128>}, {pipeline_mode = #tpu.pipeline_mode<synchronous>, transform_indices = @transform_13, window_bounds = array<i64: 1, 128>}, {pipeline_mode = #tpu.pipeline_mode<synchronous>, transform_indices = @transform_14, window_bounds = array<i64: 128, 128>}, {pipeline_mode = #tpu.pipeline_mode<synchronous>, transform_indices = @transform_15, window_bounds = array<i64: 1, 128>}, {pipeline_mode = #tpu.pipeline_mode<synchronous>, transform_indices = @transform_16, window_bounds = array<i64: 128, 128>}, {pipeline_mode = #tpu.pipeline_mode<synchronous>, transform_indices = @transform_17, window_bounds = array<i64: 1, 128>}, {pipeline_mode = #tpu.pipeline_mode<synchronous>, transform_indices = @transform_18, window_bounds = array<i64: 1, 128>}, {pipeline_mode = #tpu.pipeline_mode<synchronous>, transform_indices = @transform_19, window_bounds = array<i64: 1, 1>}, {transform_indices = @transform_20, window_bounds = array<i64: 1, 8, 1>}]} {
    %c0_i32 = arith.constant 0 : i32
    %0 = arith.cmpi eq, %arg1, %c0_i32 : i32
    %1 = arith.extui %0 : i1 to i32
    %c0_i32_0 = arith.constant 0 : i32
    %2 = arith.cmpi ne, %1, %c0_i32_0 : i32
    scf.if %2 {
      %c0_35 = arith.constant 0 : index
      %c0_36 = arith.constant 0 : index
      %70 = vector.load %arg3[%c0_35, %c0_36] : memref<8x128xbf16, #tpu.memory_space<vmem>>, vector<8x128xbf16>
      %71 = arith.extf %70 : vector<8x128xbf16> to vector<8x128xf32>
      %cst_37 = arith.constant dense<0.000000e+00> : vector<8xf32>
      %72 = vector.multi_reduction <add>, %71, %cst_37 [1] : vector<8x128xf32> to vector<8xf32>
      %73 = vector.shape_cast %72 : vector<8xf32> to vector<8x1xf32>
      %cst_38 = arith.constant 3.125000e-02 : f32
      %74 = vector.broadcast %cst_38 : f32 to vector<8x1xf32>
      %75 = arith.mulf %73, %74 : vector<8x1xf32>
      %76 = arith.mulf %71, %71 : vector<8x128xf32>
      %cst_39 = arith.constant dense<0.000000e+00> : vector<8xf32>
      %77 = vector.multi_reduction <add>, %76, %cst_39 [1] : vector<8x128xf32> to vector<8xf32>
      %78 = vector.shape_cast %77 : vector<8xf32> to vector<8x1xf32>
      %cst_40 = arith.constant 3.125000e-02 : f32
      %79 = vector.broadcast %cst_40 : f32 to vector<8x1xf32>
      %80 = arith.mulf %78, %79 : vector<8x1xf32>
      %81 = arith.mulf %75, %75 : vector<8x1xf32>
      %82 = arith.subf %80, %81 : vector<8x1xf32>
      %83 = vector.broadcast %75 : vector<8x1xf32> to vector<8x128xf32>
      %84 = arith.subf %71, %83 : vector<8x128xf32>
      %cst_41 = arith.constant 9.99999974E-6 : f32
      %85 = vector.broadcast %cst_41 : f32 to vector<8x1xf32>
      %86 = arith.addf %82, %85 : vector<8x1xf32>
      %87 = math.rsqrt %86 : vector<8x1xf32>
      %88 = vector.broadcast %87 : vector<8x1xf32> to vector<8x128xf32>
      %89 = arith.mulf %84, %88 : vector<8x128xf32>
      %c0_42 = arith.constant 0 : index
      %c0_43 = arith.constant 0 : index
      %90 = vector.load %arg5[%c0_42, %c0_43] : memref<1x128xf32, #tpu.memory_space<vmem>>, vector<1x128xf32>
      %91 = vector.broadcast %90 : vector<1x128xf32> to vector<8x128xf32>
      %92 = arith.mulf %89, %91 : vector<8x128xf32>
      %c0_44 = arith.constant 0 : index
      %c0_45 = arith.constant 0 : index
      %93 = vector.load %arg6[%c0_44, %c0_45] : memref<1x128xf32, #tpu.memory_space<vmem>>, vector<1x128xf32>
      %94 = vector.broadcast %93 : vector<1x128xf32> to vector<8x128xf32>
      %95 = arith.addf %92, %94 : vector<8x128xf32>
      %96 = arith.truncf %95 : vector<8x128xf32> to vector<8x128xbf16>
      %c0_46 = arith.constant 0 : index
      %c0_47 = arith.constant 0 : index
      %97 = vector.load %arg7[%c0_46, %c0_47] : memref<128x128xbf16, #tpu.memory_space<vmem>>, vector<128x128xbf16>
      %cst_48 = arith.constant dense<0.000000e+00> : vector<8x128xf32>
      %98 = tpu.matmul %96, %97, %cst_48 {dimension_numbers = #tpu.dot_dimension_numbers<[1], [0], [0], [1], [0, 0, 1, 1], [], []>} : vector<8x128xbf16>, vector<128x128xbf16>, vector<8x128xf32> -> vector<8x128xf32>
      %c0_49 = arith.constant 0 : index
      %c0_50 = arith.constant 0 : index
      %99 = vector.load %arg8[%c0_49, %c0_50] : memref<1x128xf32, #tpu.memory_space<vmem>>, vector<1x128xf32>
      %100 = vector.broadcast %99 : vector<1x128xf32> to vector<8x128xf32>
      %101 = arith.addf %98, %100 : vector<8x128xf32>
      %102 = arith.truncf %101 : vector<8x128xf32> to vector<8x128xbf16>
      %c0_51 = arith.constant 0 : index
      %c0_52 = arith.constant 0 : index
      %103 = vector.load %arg9[%c0_51, %c0_52] : memref<128x128xbf16, #tpu.memory_space<vmem>>, vector<128x128xbf16>
      %cst_53 = arith.constant dense<0.000000e+00> : vector<8x128xf32>
      %104 = tpu.matmul %102, %103, %cst_53 {dimension_numbers = #tpu.dot_dimension_numbers<[1], [0], [0], [1], [0, 0, 1, 1], [], []>} : vector<8x128xbf16>, vector<128x128xbf16>, vector<8x128xf32> -> vector<8x128xf32>
      %cst_54 = arith.constant 0.176776692 : f32
      %105 = vector.broadcast %cst_54 : f32 to vector<8x128xf32>
      %106 = arith.mulf %104, %105 : vector<8x128xf32>
      %c0_55 = arith.constant 0 : index
      %c0_56 = arith.constant 0 : index
      %107 = vector.load %arg23[%c0_55, %c0_56] : memref<8x128xf32, #tpu.memory_space<vmem>>, vector<8x128xf32>
      tpu.vector_store %arg23[%c0_55, %c0_56], %106 {strides = array<i32>} : memref<8x128xf32, #tpu.memory_space<vmem>>, vector<8x128xf32>,
      %cst_57 = arith.constant -1.000000e+30 : f32
      %108 = vector.broadcast %cst_57 : f32 to vector<8x1xf32>
      %c0_58 = arith.constant 0 : index
      %c0_59 = arith.constant 0 : index
      %109 = vector.load %arg24[%c0_58, %c0_59] : memref<8x1xf32, #tpu.memory_space<vmem>>, vector<8x1xf32>
      tpu.vector_store %arg24[%c0_58, %c0_59], %108 {strides = array<i32>} : memref<8x1xf32, #tpu.memory_space<vmem>>, vector<8x1xf32>,
      %cst_60 = arith.constant 0.000000e+00 : f32
      %110 = vector.broadcast %cst_60 : f32 to vector<8x1xf32>
      %c0_61 = arith.constant 0 : index
      %c0_62 = arith.constant 0 : index
      %111 = vector.load %arg25[%c0_61, %c0_62] : memref<8x1xf32, #tpu.memory_space<vmem>>, vector<8x1xf32>
      tpu.vector_store %arg25[%c0_61, %c0_62], %110 {strides = array<i32>} : memref<8x1xf32, #tpu.memory_space<vmem>>, vector<8x1xf32>,
      %cst_63 = arith.constant 0.000000e+00 : f32
      %112 = vector.broadcast %cst_63 : f32 to vector<8x128xf32>
      %c0_64 = arith.constant 0 : index
      %c0_65 = arith.constant 0 : index
      %113 = vector.load %arg26[%c0_64, %c0_65] : memref<8x128xf32, #tpu.memory_space<vmem>>, vector<8x128xf32>
      tpu.vector_store %arg26[%c0_64, %c0_65], %112 {strides = array<i32>} : memref<8x128xf32, #tpu.memory_space<vmem>>, vector<8x128xf32>,
    } else {
    }
    %c0 = arith.constant 0 : index
    %c0_1 = arith.constant 0 : index
    %c0_2 = arith.constant 0 : index
    %3 = vector.load %arg2[%c0, %c0_1, %c0_2] : memref<8x8x128xbf16, #tpu.memory_space<vmem>>, vector<8x8x128xbf16>
    %4 = arith.extf %3 : vector<8x8x128xbf16> to vector<8x8x128xf32>
    %cst = arith.constant dense<0.000000e+00> : vector<8x8xf32>
    %5 = vector.multi_reduction <add>, %4, %cst [2] : vector<8x8x128xf32> to vector<8x8xf32>
    %6 = vector.shape_cast %5 : vector<8x8xf32> to vector<8x8x1xf32>
    %cst_3 = arith.constant 3.125000e-02 : f32
    %7 = vector.broadcast %cst_3 : f32 to vector<8x8x1xf32>
    %8 = arith.mulf %6, %7 : vector<8x8x1xf32>
    %9 = arith.mulf %4, %4 : vector<8x8x128xf32>
    %cst_4 = arith.constant dense<0.000000e+00> : vector<8x8xf32>
    %10 = vector.multi_reduction <add>, %9, %cst_4 [2] : vector<8x8x128xf32> to vector<8x8xf32>
    %11 = vector.shape_cast %10 : vector<8x8xf32> to vector<8x8x1xf32>
    %cst_5 = arith.constant 3.125000e-02 : f32
    %12 = vector.broadcast %cst_5 : f32 to vector<8x8x1xf32>
    %13 = arith.mulf %11, %12 : vector<8x8x1xf32>
    %14 = arith.mulf %8, %8 : vector<8x8x1xf32>
    %15 = arith.subf %13, %14 : vector<8x8x1xf32>
    %16 = vector.broadcast %8 : vector<8x8x1xf32> to vector<8x8x128xf32>
    %17 = arith.subf %4, %16 : vector<8x8x128xf32>
    %cst_6 = arith.constant 9.99999974E-6 : f32
    %18 = vector.broadcast %cst_6 : f32 to vector<8x8x1xf32>
    %19 = arith.addf %15, %18 : vector<8x8x1xf32>
    %20 = math.rsqrt %19 : vector<8x8x1xf32>
    %21 = vector.broadcast %20 : vector<8x8x1xf32> to vector<8x8x128xf32>
    %22 = arith.mulf %17, %21 : vector<8x8x128xf32>
    %c0_7 = arith.constant 0 : index
    %c0_8 = arith.constant 0 : index
    %23 = vector.load %arg5[%c0_7, %c0_8] : memref<1x128xf32, #tpu.memory_space<vmem>>, vector<1x128xf32>
    %24 = vector.shape_cast %23 : vector<1x128xf32> to vector<1x1x128xf32>
    %25 = vector.broadcast %24 : vector<1x1x128xf32> to vector<8x8x128xf32>
    %26 = arith.mulf %22, %25 : vector<8x8x128xf32>
    %c0_9 = arith.constant 0 : index
    %c0_10 = arith.constant 0 : index
    %27 = vector.load %arg6[%c0_9, %c0_10] : memref<1x128xf32, #tpu.memory_space<vmem>>, vector<1x128xf32>
    %28 = vector.shape_cast %27 : vector<1x128xf32> to vector<1x1x128xf32>
    %29 = vector.broadcast %28 : vector<1x1x128xf32> to vector<8x8x128xf32>
    %30 = arith.addf %26, %29 : vector<8x8x128xf32>
    %31 = arith.truncf %30 : vector<8x8x128xf32> to vector<8x8x128xbf16>
    %c0_11 = arith.constant 0 : index
    %c0_12 = arith.constant 0 : index
    %32 = vector.load %arg23[%c0_11, %c0_12] : memref<8x128xf32, #tpu.memory_space<vmem>>, vector<8x128xf32>
    %33 = arith.truncf %32 : vector<8x128xf32> to vector<8x128xbf16>
    %34 = vector.shape_cast %33 : vector<8x128xbf16> to vector<8x1x128xbf16>
    "tpu.trace_start"() <{level = 10 : i32, message = "bqd,bkd->bqk"}> : () -> ()
    %cst_13 = arith.constant dense<0.000000e+00> : vector<8x1x8xf32>
    %35 = tpu.matmul %34, %31, %cst_13 {dimension_numbers = #tpu.dot_dimension_numbers<[2], [2], [1], [1], [0, 0, 0, 1, 1, 1], [0], [0]>} : vector<8x1x128xbf16>, vector<8x8x128xbf16>, vector<8x1x8xf32> -> vector<8x1x8xf32>
    "tpu.trace_stop"() : () -> ()
    %36 = vector.shape_cast %35 : vector<8x1x8xf32> to vector<8x8xf32>
    %c0_14 = arith.constant 0 : index
    %c0_15 = arith.constant 0 : index
    %37 = vector.load %arg4[%c0_14, %c0_15] : memref<8x8xf32, #tpu.memory_space<vmem>>, vector<8x8xf32>
    %cst_16 = arith.constant 5.000000e-01 : f32
    %38 = vector.broadcast %cst_16 : f32 to vector<8x8xf32>
    %39 = arith.cmpf ogt, %37, %38 : vector<8x8xf32>
    %cst_17 = arith.constant -1.000000e+09 : f32
    %40 = vector.broadcast %cst_17 : f32 to vector<8x8xf32>
    %41 = arith.select %39, %36, %40 : vector<8x8xi1>, vector<8x8xf32>
    %c0_18 = arith.constant 0 : index
    %c0_19 = arith.constant 0 : index
    %42 = vector.load %arg24[%c0_18, %c0_19] : memref<8x1xf32, #tpu.memory_space<vmem>>, vector<8x1xf32>
    %cst_20 = arith.constant dense<0xFF800000> : vector<8xf32>
    %43 = vector.multi_reduction <maximumf>, %41, %cst_20 [1] : vector<8x8xf32> to vector<8xf32>
    %44 = vector.shape_cast %43 : vector<8xf32> to vector<8x1xf32>
    %45 = arith.maximumf %42, %44 : vector<8x1xf32>
    %46 = arith.subf %42, %45 : vector<8x1xf32>
    %47 = math.exp %46 : vector<8x1xf32>
    %48 = vector.broadcast %45 : vector<8x1xf32> to vector<8x8xf32>
    %49 = arith.subf %41, %48 : vector<8x8xf32>
    %50 = math.exp %49 : vector<8x8xf32>
    %c0_21 = arith.constant 0 : index
    %c0_22 = arith.constant 0 : index
    %51 = vector.load %arg25[%c0_21, %c0_22] : memref<8x1xf32, #tpu.memory_space<vmem>>, vector<8x1xf32>
    %52 = arith.mulf %47, %51 : vector<8x1xf32>
    %cst_23 = arith.constant dense<0.000000e+00> : vector<8xf32>
    %53 = vector.multi_reduction <add>, %50, %cst_23 [1] : vector<8x8xf32> to vector<8xf32>
    %54 = vector.shape_cast %53 : vector<8xf32> to vector<8x1xf32>
    %55 = arith.addf %52, %54 : vector<8x1xf32>
    %c0_24 = arith.constant 0 : index
    %c0_25 = arith.constant 0 : index
    %56 = vector.load %arg25[%c0_24, %c0_25] : memref<8x1xf32, #tpu.memory_space<vmem>>, vector<8x1xf32>
    tpu.vector_store %arg25[%c0_24, %c0_25], %55 {strides = array<i32>} : memref<8x1xf32, #tpu.memory_space<vmem>>, vector<8x1xf32>,
    %57 = arith.truncf %50 : vector<8x8xf32> to vector<8x8xbf16>
    %58 = vector.shape_cast %57 : vector<8x8xbf16> to vector<8x1x8xbf16>
    "tpu.trace_start"() <{level = 10 : i32, message = "bqk,bkd->bqd"}> : () -> ()
    %cst_26 = arith.constant dense<0.000000e+00> : vector<8x1x128xf32>
    %59 = tpu.matmul %58, %31, %cst_26 {dimension_numbers = #tpu.dot_dimension_numbers<[2], [1], [1], [2], [0, 0, 0, 1, 1, 2], [0], [0]>} : vector<8x1x8xbf16>, vector<8x8x128xbf16>, vector<8x1x128xf32> -> vector<8x1x128xf32>
    "tpu.trace_stop"() : () -> ()
    %60 = vector.shape_cast %59 : vector<8x1x128xf32> to vector<8x128xf32>
    %c0_27 = arith.constant 0 : index
    %c0_28 = arith.constant 0 : index
    %61 = vector.load %arg26[%c0_27, %c0_28] : memref<8x128xf32, #tpu.memory_space<vmem>>, vector<8x128xf32>
    %62 = vector.broadcast %47 : vector<8x1xf32> to vector<8x128xf32>
    %63 = arith.mulf %62, %61 : vector<8x128xf32>
    %64 = arith.addf %63, %60 : vector<8x128xf32>
    %c0_29 = arith.constant 0 : index
    %c0_30 = arith.constant 0 : index
    %65 = vector.load %arg26[%c0_29, %c0_30] : memref<8x128xf32, #tpu.memory_space<vmem>>, vector<8x128xf32>
    tpu.vector_store %arg26[%c0_29, %c0_30], %64 {strides = array<i32>} : memref<8x128xf32, #tpu.memory_space<vmem>>, vector<8x128xf32>,
    %c0_31 = arith.constant 0 : index
    %c0_32 = arith.constant 0 : index
    %66 = vector.load %arg24[%c0_31, %c0_32] : memref<8x1xf32, #tpu.memory_space<vmem>>, vector<8x1xf32>
    tpu.vector_store %arg24[%c0_31, %c0_32], %45 {strides = array<i32>} : memref<8x1xf32, #tpu.memory_space<vmem>>, vector<8x1xf32>,
    %c0_i32_33 = arith.constant 0 : i32
    %67 = arith.cmpi eq, %arg1, %c0_i32_33 : i32
    %68 = arith.extui %67 : i1 to i32
    %c0_i32_34 = arith.constant 0 : i32
    %69 = arith.cmpi ne, %68, %c0_i32_34 : i32
    scf.if %69 {
      %c0_35 = arith.constant 0 : index
      %c0_36 = arith.constant 0 : index
      %70 = vector.load %arg25[%c0_35, %c0_36] : memref<8x1xf32, #tpu.memory_space<vmem>>, vector<8x1xf32>
      %71 = tpu.reciprocal %70 {approx = true} : vector<8x1xf32> -> vector<8x1xf32>
      %c0_37 = arith.constant 0 : index
      %c0_38 = arith.constant 0 : index
      %72 = vector.load %arg26[%c0_37, %c0_38] : memref<8x128xf32, #tpu.memory_space<vmem>>, vector<8x128xf32>
      %73 = vector.broadcast %71 : vector<8x1xf32> to vector<8x128xf32>
      %74 = arith.mulf %72, %73 : vector<8x128xf32>
      %75 = arith.truncf %74 : vector<8x128xf32> to vector<8x128xbf16>
      %c0_39 = arith.constant 0 : index
      %c0_40 = arith.constant 0 : index
      %76 = vector.load %arg10[%c0_39, %c0_40] : memref<128x128xbf16, #tpu.memory_space<vmem>>, vector<128x128xbf16>
      %cst_41 = arith.constant dense<0.000000e+00> : vector<8x128xf32>
      %77 = tpu.matmul %75, %76, %cst_41 {dimension_numbers = #tpu.dot_dimension_numbers<[1], [0], [0], [1], [0, 0, 1, 1], [], []>} : vector<8x128xbf16>, vector<128x128xbf16>, vector<8x128xf32> -> vector<8x128xf32>
      %c0_42 = arith.constant 0 : index
      %c0_43 = arith.constant 0 : index
      %78 = vector.load %arg11[%c0_42, %c0_43] : memref<1x128xf32, #tpu.memory_space<vmem>>, vector<1x128xf32>
      %79 = vector.broadcast %78 : vector<1x128xf32> to vector<8x128xf32>
      %80 = arith.addf %77, %79 : vector<8x128xf32>
      %81 = arith.truncf %80 : vector<8x128xf32> to vector<8x128xbf16>
      %c0_44 = arith.constant 0 : index
      %c0_45 = arith.constant 0 : index
      %82 = vector.load %arg12[%c0_44, %c0_45] : memref<128x128xbf16, #tpu.memory_space<vmem>>, vector<128x128xbf16>
      %cst_46 = arith.constant dense<0.000000e+00> : vector<8x128xf32>
      %83 = tpu.matmul %81, %82, %cst_46 {dimension_numbers = #tpu.dot_dimension_numbers<[1], [0], [0], [1], [0, 0, 1, 1], [], []>} : vector<8x128xbf16>, vector<128x128xbf16>, vector<8x128xf32> -> vector<8x128xf32>
      %c0_47 = arith.constant 0 : index
      %c0_48 = arith.constant 0 : index
      %84 = vector.load %arg13[%c0_47, %c0_48] : memref<1x128xf32, #tpu.memory_space<vmem>>, vector<1x128xf32>
      %85 = vector.broadcast %84 : vector<1x128xf32> to vector<8x128xf32>
      %86 = arith.addf %83, %85 : vector<8x128xf32>
      %c0_49 = arith.constant 0 : index
      %c0_50 = arith.constant 0 : index
      %87 = vector.load %arg3[%c0_49, %c0_50] : memref<8x128xbf16, #tpu.memory_space<vmem>>, vector<8x128xbf16>
      %88 = arith.extf %87 : vector<8x128xbf16> to vector<8x128xf32>
      %89 = arith.addf %88, %86 : vector<8x128xf32>
      %cst_51 = arith.constant dense<0.000000e+00> : vector<8xf32>
      %90 = vector.multi_reduction <add>, %89, %cst_51 [1] : vector<8x128xf32> to vector<8xf32>
      %91 = vector.shape_cast %90 : vector<8xf32> to vector<8x1xf32>
      %cst_52 = arith.constant 3.125000e-02 : f32
      %92 = vector.broadcast %cst_52 : f32 to vector<8x1xf32>
      %93 = arith.mulf %91, %92 : vector<8x1xf32>
      %94 = arith.mulf %89, %89 : vector<8x128xf32>
      %cst_53 = arith.constant dense<0.000000e+00> : vector<8xf32>
      %95 = vector.multi_reduction <add>, %94, %cst_53 [1] : vector<8x128xf32> to vector<8xf32>
      %96 = vector.shape_cast %95 : vector<8xf32> to vector<8x1xf32>
      %cst_54 = arith.constant 3.125000e-02 : f32
      %97 = vector.broadcast %cst_54 : f32 to vector<8x1xf32>
      %98 = arith.mulf %96, %97 : vector<8x1xf32>
      %99 = arith.mulf %93, %93 : vector<8x1xf32>
      %100 = arith.subf %98, %99 : vector<8x1xf32>
      %101 = vector.broadcast %93 : vector<8x1xf32> to vector<8x128xf32>
      %102 = arith.subf %89, %101 : vector<8x128xf32>
      %cst_55 = arith.constant 9.99999974E-6 : f32
      %103 = vector.broadcast %cst_55 : f32 to vector<8x1xf32>
      %104 = arith.addf %100, %103 : vector<8x1xf32>
      %105 = math.rsqrt %104 : vector<8x1xf32>
      %106 = vector.broadcast %105 : vector<8x1xf32> to vector<8x128xf32>
      %107 = arith.mulf %102, %106 : vector<8x128xf32>
      %c0_56 = arith.constant 0 : index
      %c0_57 = arith.constant 0 : index
      %108 = vector.load %arg14[%c0_56, %c0_57] : memref<1x128xf32, #tpu.memory_space<vmem>>, vector<1x128xf32>
      %109 = vector.broadcast %108 : vector<1x128xf32> to vector<8x128xf32>
      %110 = arith.mulf %107, %109 : vector<8x128xf32>
      %c0_58 = arith.constant 0 : index
      %c0_59 = arith.constant 0 : index
      %111 = vector.load %arg15[%c0_58, %c0_59] : memref<1x128xf32, #tpu.memory_space<vmem>>, vector<1x128xf32>
      %112 = vector.broadcast %111 : vector<1x128xf32> to vector<8x128xf32>
      %113 = arith.addf %110, %112 : vector<8x128xf32>
      %114 = arith.truncf %113 : vector<8x128xf32> to vector<8x128xbf16>
      %c0_60 = arith.constant 0 : index
      %c0_61 = arith.constant 0 : index
      %115 = vector.load %arg16[%c0_60, %c0_61] : memref<128x128xbf16, #tpu.memory_space<vmem>>, vector<128x128xbf16>
      %cst_62 = arith.constant dense<0.000000e+00> : vector<8x128xf32>
      %116 = tpu.matmul %114, %115, %cst_62 {dimension_numbers = #tpu.dot_dimension_numbers<[1], [0], [0], [1], [0, 0, 1, 1], [], []>} : vector<8x128xbf16>, vector<128x128xbf16>, vector<8x128xf32> -> vector<8x128xf32>
      %c0_63 = arith.constant 0 : index
      %c0_64 = arith.constant 0 : index
      %117 = vector.load %arg17[%c0_63, %c0_64] : memref<1x128xf32, #tpu.memory_space<vmem>>, vector<1x128xf32>
      %118 = vector.broadcast %117 : vector<1x128xf32> to vector<8x128xf32>
      %119 = arith.addf %116, %118 : vector<8x128xf32>
      %120 = arith.mulf %119, %119 : vector<8x128xf32>
      %121 = arith.mulf %119, %120 : vector<8x128xf32>
      %cst_65 = arith.constant 4.471500e-02 : f32
      %122 = vector.broadcast %cst_65 : f32 to vector<8x128xf32>
      %123 = arith.mulf %122, %121 : vector<8x128xf32>
      %124 = arith.addf %119, %123 : vector<8x128xf32>
      %cst_66 = arith.constant 0.797884583 : f32
      %125 = vector.broadcast %cst_66 : f32 to vector<8x128xf32>
      %126 = arith.mulf %125, %124 : vector<8x128xf32>
      %127 = math.tanh %126 : vector<8x128xf32>
      %cst_67 = arith.constant 1.000000e+00 : f32
      %128 = vector.broadcast %cst_67 : f32 to vector<8x128xf32>
      %129 = arith.addf %128, %127 : vector<8x128xf32>
      %cst_68 = arith.constant 5.000000e-01 : f32
      %130 = vector.broadcast %cst_68 : f32 to vector<8x128xf32>
      %131 = arith.mulf %130, %129 : vector<8x128xf32>
      %132 = arith.mulf %119, %131 : vector<8x128xf32>
      %133 = arith.truncf %132 : vector<8x128xf32> to vector<8x128xbf16>
      %c0_69 = arith.constant 0 : index
      %c0_70 = arith.constant 0 : index
      %134 = vector.load %arg18[%c0_69, %c0_70] : memref<128x128xbf16, #tpu.memory_space<vmem>>, vector<128x128xbf16>
      %cst_71 = arith.constant dense<0.000000e+00> : vector<8x128xf32>
      %135 = tpu.matmul %133, %134, %cst_71 {dimension_numbers = #tpu.dot_dimension_numbers<[1], [0], [0], [1], [0, 0, 1, 1], [], []>} : vector<8x128xbf16>, vector<128x128xbf16>, vector<8x128xf32> -> vector<8x128xf32>
      %c0_72 = arith.constant 0 : index
      %c0_73 = arith.constant 0 : index
      %136 = vector.load %arg19[%c0_72, %c0_73] : memref<1x128xf32, #tpu.memory_space<vmem>>, vector<1x128xf32>
      %137 = vector.broadcast %136 : vector<1x128xf32> to vector<8x128xf32>
      %138 = arith.addf %135, %137 : vector<8x128xf32>
      %139 = arith.addf %89, %138 : vector<8x128xf32>
      %c0_74 = arith.constant 0 : index
      %c0_75 = arith.constant 0 : index
      %140 = vector.load %arg20[%c0_74, %c0_75] : memref<1x128xf32, #tpu.memory_space<vmem>>, vector<1x128xf32>
      %141 = vector.broadcast %140 : vector<1x128xf32> to vector<8x128xf32>
      %142 = arith.mulf %139, %141 : vector<8x128xf32>
      %cst_76 = arith.constant dense<0.000000e+00> : vector<8xf32>
      %143 = vector.multi_reduction <add>, %142, %cst_76 [1] : vector<8x128xf32> to vector<8xf32>
      %144 = vector.shape_cast %143 : vector<8xf32> to vector<8x1xf32>
      %c0_77 = arith.constant 0 : index
      %c0_78 = arith.constant 0 : index
      %145 = vector.load %arg21[%c0_77, %c0_78] : memref<1x1xf32, #tpu.memory_space<vmem>>, vector<1x1xf32>
      %146 = vector.broadcast %145 : vector<1x1xf32> to vector<8x1xf32>
      %147 = arith.addf %144, %146 : vector<8x1xf32>
      %148 = vector.shape_cast %147 : vector<8x1xf32> to vector<1x8x1xf32>
      %c0_79 = arith.constant 0 : index
      %c0_80 = arith.constant 0 : index
      %c0_81 = arith.constant 0 : index
      %149 = vector.load %arg22[%c0_79, %c0_80, %c0_81] : memref<1x8x1xf32, #tpu.memory_space<vmem>>, vector<1x8x1xf32>
      tpu.vector_store %arg22[%c0_79, %c0_80, %c0_81], %148 {strides = array<i32>} : memref<1x8x1xf32, #tpu.memory_space<vmem>>, vector<1x8x1xf32>,
    } else {
    }
    return
  }
  func.func @transform_0(%arg0: i32, %arg1: i32) -> (i32, i32, i32) {
    %c0_i32 = arith.constant 0 : i32
    %c0_i32_0 = arith.constant 0 : i32
    return %arg0, %arg1, %c0_i32 : i32, i32, i32
  }
  func.func @transform_1(%arg0: i32, %arg1: i32) -> (i32, i32) {
    %c0_i32 = arith.constant 0 : i32
    %c0_i32_0 = arith.constant 0 : i32
    return %arg0, %c0_i32 : i32, i32
  }
  func.func @transform_2(%arg0: i32, %arg1: i32) -> (i32, i32) {
    %c0_i32 = arith.constant 0 : i32
    return %arg0, %arg1 : i32, i32
  }
  func.func @transform_3(%arg0: i32, %arg1: i32) -> (i32, i32) {
    %c0_i32 = arith.constant 0 : i32
    %c0_i32_0 = arith.constant 0 : i32
    %c0_i32_1 = arith.constant 0 : i32
    return %c0_i32, %c0_i32_0 : i32, i32
  }
  func.func @transform_4(%arg0: i32, %arg1: i32) -> (i32, i32) {
    %c0_i32 = arith.constant 0 : i32
    %c0_i32_0 = arith.constant 0 : i32
    %c0_i32_1 = arith.constant 0 : i32
    return %c0_i32, %c0_i32_0 : i32, i32
  }
  func.func @transform_5(%arg0: i32, %arg1: i32) -> (i32, i32) {
    %c0_i32 = arith.constant 0 : i32
    %c0_i32_0 = arith.constant 0 : i32
    %c0_i32_1 = arith.constant 0 : i32
    return %c0_i32, %c0_i32_0 : i32, i32
  }
  func.func @transform_6(%arg0: i32, %arg1: i32) -> (i32, i32) {
    %c0_i32 = arith.constant 0 : i32
    %c0_i32_0 = arith.constant 0 : i32
    %c0_i32_1 = arith.constant 0 : i32
    return %c0_i32, %c0_i32_0 : i32, i32
  }
  func.func @transform_7(%arg0: i32, %arg1: i32) -> (i32, i32) {
    %c0_i32 = arith.constant 0 : i32
    %c0_i32_0 = arith.constant 0 : i32
    %c0_i32_1 = arith.constant 0 : i32
    return %c0_i32, %c0_i32_0 : i32, i32
  }
  func.func @transform_8(%arg0: i32, %arg1: i32) -> (i32, i32) {
    %c0_i32 = arith.constant 0 : i32
    %c0_i32_0 = arith.constant 0 : i32
    %c0_i32_1 = arith.constant 0 : i32
    return %c0_i32, %c0_i32_0 : i32, i32
  }
  func.func @transform_9(%arg0: i32, %arg1: i32) -> (i32, i32) {
    %c0_i32 = arith.constant 0 : i32
    %c0_i32_0 = arith.constant 0 : i32
    %c0_i32_1 = arith.constant 0 : i32
    return %c0_i32, %c0_i32_0 : i32, i32
  }
  func.func @transform_10(%arg0: i32, %arg1: i32) -> (i32, i32) {
    %c0_i32 = arith.constant 0 : i32
    %c0_i32_0 = arith.constant 0 : i32
    %c0_i32_1 = arith.constant 0 : i32
    return %c0_i32, %c0_i32_0 : i32, i32
  }
  func.func @transform_11(%arg0: i32, %arg1: i32) -> (i32, i32) {
    %c0_i32 = arith.constant 0 : i32
    %c0_i32_0 = arith.constant 0 : i32
    %c0_i32_1 = arith.constant 0 : i32
    return %c0_i32, %c0_i32_0 : i32, i32
  }
  func.func @transform_12(%arg0: i32, %arg1: i32) -> (i32, i32) {
    %c0_i32 = arith.constant 0 : i32
    %c0_i32_0 = arith.constant 0 : i32
    %c0_i32_1 = arith.constant 0 : i32
    return %c0_i32, %c0_i32_0 : i32, i32
  }
  func.func @transform_13(%arg0: i32, %arg1: i32) -> (i32, i32) {
    %c0_i32 = arith.constant 0 : i32
    %c0_i32_0 = arith.constant 0 : i32
    %c0_i32_1 = arith.constant 0 : i32
    return %c0_i32, %c0_i32_0 : i32, i32
  }
  func.func @transform_14(%arg0: i32, %arg1: i32) -> (i32, i32) {
    %c0_i32 = arith.constant 0 : i32
    %c0_i32_0 = arith.constant 0 : i32
    %c0_i32_1 = arith.constant 0 : i32
    return %c0_i32, %c0_i32_0 : i32, i32
  }
  func.func @transform_15(%arg0: i32, %arg1: i32) -> (i32, i32) {
    %c0_i32 = arith.constant 0 : i32
    %c0_i32_0 = arith.constant 0 : i32
    %c0_i32_1 = arith.constant 0 : i32
    return %c0_i32, %c0_i32_0 : i32, i32
  }
  func.func @transform_16(%arg0: i32, %arg1: i32) -> (i32, i32) {
    %c0_i32 = arith.constant 0 : i32
    %c0_i32_0 = arith.constant 0 : i32
    %c0_i32_1 = arith.constant 0 : i32
    return %c0_i32, %c0_i32_0 : i32, i32
  }
  func.func @transform_17(%arg0: i32, %arg1: i32) -> (i32, i32) {
    %c0_i32 = arith.constant 0 : i32
    %c0_i32_0 = arith.constant 0 : i32
    %c0_i32_1 = arith.constant 0 : i32
    return %c0_i32, %c0_i32_0 : i32, i32
  }
  func.func @transform_18(%arg0: i32, %arg1: i32) -> (i32, i32) {
    %c0_i32 = arith.constant 0 : i32
    %c0_i32_0 = arith.constant 0 : i32
    %c0_i32_1 = arith.constant 0 : i32
    return %c0_i32, %c0_i32_0 : i32, i32
  }
  func.func @transform_19(%arg0: i32, %arg1: i32) -> (i32, i32) {
    %c0_i32 = arith.constant 0 : i32
    %c0_i32_0 = arith.constant 0 : i32
    %c0_i32_1 = arith.constant 0 : i32
    return %c0_i32, %c0_i32_0 : i32, i32
  }
  func.func @transform_20(%arg0: i32, %arg1: i32) -> (i32, i32, i32) {
    %c0_i32 = arith.constant 0 : i32
    %c0_i32_0 = arith.constant 0 : i32
    %c0_i32_1 = arith.constant 0 : i32
    return %arg0, %c0_i32, %c0_i32_0 : i32, i32, i32
  }
}

</mosaic_0001>

<llo_original>
// kernel: reasoning_reward_forward.1
$region0: #{reasoning_reward_forward.1}
  #allocation0 [shape = 'u32[]', space=smem, size = 0x4, offset = 0x4, fixed_abs, tag = 'smem constant byte address 0x4 - core index']
  #allocation1 [shape = 'u32[144,128]{1,0:T(1,128)}', space=vmem, size = 0x12000, scoped, tag = 'internal scratch']
  #allocation2 [shape = 'f32[8,128]{1,0:T(8,128)}', space=vmem, size = 0x1000, scoped, tag = 'scratch operand']
  #allocation3 [shape = 'f32[8,1]{1,0:T(8,128)}', space=vmem, size = 0x1000, scoped, tag = 'scratch operand']
  #allocation4 [shape = 'f32[8,1]{1,0:T(8,128)}', space=vmem, size = 0x1000, scoped, tag = 'scratch operand']
  #allocation5 [shape = 'f32[8,128]{1,0:T(8,128)}', space=vmem, size = 0x1000, scoped, tag = 'scratch operand']
  #allocation6 [shape = 'f32[1,1]{1,0:T(1,128)S(1)}', space=vmem, size = 0x200, scoped, tag = 'scoped memory for reasoning_reward_forward.1']
  %s0 = inlined_call_operand.vmem [shape: bf16[8,8,128], index: 0, kind: input, shape index: {}]
  %s1 = inlined_call_operand.vmem [shape: bf16[8,128], index: 1, kind: input, shape index: {}]
  %s2 = inlined_call_operand.vmem [shape: f32[8,8], index: 2, kind: input, shape index: {}]
  %s3 = inlined_call_operand.vmem [shape: f32[1,128], index: 3, kind: input, shape index: {}]
  %s4 = inlined_call_operand.vmem [shape: f32[1,128], index: 4, kind: input, shape index: {}]
  %s5 = inlined_call_operand.vmem [shape: bf16[128,128], index: 5, kind: input, shape index: {}]
  %s6 = inlined_call_operand.vmem [shape: f32[1,128], index: 6, kind: input, shape index: {}]
  %s7 = inlined_call_operand.vmem [shape: bf16[128,128], index: 7, kind: input, shape index: {}]
  %s8 = inlined_call_operand.vmem [shape: bf16[128,128], index: 8, kind: input, shape index: {}]
  %s9 = inlined_call_operand.vmem [shape: f32[1,128], index: 9, kind: input, shape index: {}]
  %s10 = inlined_call_operand.hbm [shape: bf16[128,128], index: 10, kind: input, shape index: {}]
  %s11 = inlined_call_operand.vmem [shape: f32[1,128], index: 11, kind: input, shape index: {}]
  %s12 = inlined_call_operand.vmem [shape: f32[1,128], index: 12, kind: input, shape index: {}]
  %s13 = inlined_call_operand.vmem [shape: f32[1,128], index: 13, kind: input, shape index: {}]
  %s14 = inlined_call_operand.hbm [shape: bf16[128,128], index: 14, kind: input, shape index: {}]
  %s15 = inlined_call_operand.vmem [shape: f32[1,128], index: 15, kind: input, shape index: {}]
  %s16 = inlined_call_operand.hbm [shape: bf16[128,128], index: 16, kind: input, shape index: {}]
  %s17 = inlined_call_operand.vmem [shape: f32[1,128], index: 17, kind: input, shape index: {}]
  %s18 = inlined_call_operand.vmem [shape: f32[1,128], index: 18, kind: input, shape index: {}]
  %s19 = inlined_call_operand.<no memory space> [shape: f32[1,1], index: 19, kind: input, shape index: {}]
  %s20 = inlined_call_operand.vmem [shape: f32[1,8,1], index: 20, kind: output, shape index: {}]
  %s21 = sld [smem:[#allocation0]]
  $region110: #{reasoning_reward_forward.1} parent=0
    _
  %s23 = ssub.s32 1, %s21
  %s24 = scalar_select 0, %s23, %s21
  %v25 = vstv %s19
  %26 = vst [vmem:[#allocation6] sm:$0x1] %v25
  $region1: #{reasoning_reward_forward.1} parent=0
    #allocation7 [shape = 'u8[32768]{0}', space=vmem, size = 0x8000, scoped, tag = 'input window, operand 10, single buffered']
    #allocation8 [shape = 's32[1]{0}', space=sflag, size = 0x4, scoped, tag = 'scoped memory for reasoning_reward_forward.1']
    #allocation9 [shape = 'u8[32768]{0}', space=vmem, size = 0x8000, scoped, tag = 'input window, operand 14, single buffered']
    #allocation10 [shape = 's32[1]{0}', space=sflag, size = 0x4, scoped, tag = 'scoped memory for reasoning_reward_forward.1']
    #allocation11 [shape = 'u8[32768]{0}', space=vmem, size = 0x8000, scoped, tag = 'input window, operand 16, single buffered']
    %27 = vsyncpa [#allocation8], 0
    %28 = vsyncpa [#allocation10], 0
    // Predicated region
    $region2: #{reasoning_reward_forward.1} parent=1 // pred_check
      _
    $region3: #{reasoning_reward_forward.1} parent=1 // pred_check_branch
      %30 = sbr.rel (0) target = $region5
    $region4: #{reasoning_reward_forward.1} parent=1 // pred_region
      _
    $region5: #{reasoning_reward_forward.1} parent=1 // pred_fallthru
      _
    // Predicated region
    $region6: #{reasoning_reward_forward.1} parent=1 // pred_check
      _
    $region7: #{reasoning_reward_forward.1} parent=1 // pred_check_branch
      %32 = sbr.rel (0) target = $region9
    $region8: #{reasoning_reward_forward.1} parent=1 // pred_region
      _
    $region9: #{reasoning_reward_forward.1} parent=1 // pred_fallthru
      _
    // Predicated region
    $region10: #{reasoning_reward_forward.1} parent=1 // pred_check
      _
    $region11: #{reasoning_reward_forward.1} parent=1 // pred_check_branch
      %34 = sbr.rel (0) target = $region13
    $region12: #{reasoning_reward_forward.1} parent=1 // pred_region
      _
    $region13: #{reasoning_reward_forward.1} parent=1 // pred_fallthru
      _
    // Predicated region
    $region14: #{reasoning_reward_forward.1} parent=1 // pred_check
      _
    $region15: #{reasoning_reward_forward.1} parent=1 // pred_check_branch
      %36 = sbr.rel (0) target = $region17
    $region16: #{reasoning_reward_forward.1} parent=1 // pred_region
      _
    $region17: #{reasoning_reward_forward.1} parent=1 // pred_fallthru
      _
    // Predicated region
    $region18: #{reasoning_reward_forward.1} parent=1 // pred_check
      _
    $region19: #{reasoning_reward_forward.1} parent=1 // pred_check_branch
      %38 = sbr.rel (0) target = $region21
    $region20: #{reasoning_reward_forward.1} parent=1 // pred_region
      _
    $region21: #{reasoning_reward_forward.1} parent=1 // pred_fallthru
      _
    // Predicated region
    $region22: #{reasoning_reward_forward.1} parent=1 // pred_check
      _
    $region23: #{reasoning_reward_forward.1} parent=1 // pred_check_branch
      %40 = sbr.rel (0) target = $region25
    $region24: #{reasoning_reward_forward.1} parent=1 // pred_region
      _
    $region25: #{reasoning_reward_forward.1} parent=1 // pred_fallthru
      _
    // Predicated region
    $region26: #{reasoning_reward_forward.1} parent=1 // pred_check
      _
    $region27: #{reasoning_reward_forward.1} parent=1 // pred_check_branch
      %42 = sbr.rel (0) target = $region29
    $region28: #{reasoning_reward_forward.1} parent=1 // pred_region
      _
    $region29: #{reasoning_reward_forward.1} parent=1 // pred_fallthru
      _
    // Predicated region
    $region30: #{reasoning_reward_forward.1} parent=1 // pred_check
      _
    $region31: #{reasoning_reward_forward.1} parent=1 // pred_check_branch
      %44 = sbr.rel (0) target = $region33
    $region32: #{reasoning_reward_forward.1} parent=1 // pred_region
      _
    $region33: #{reasoning_reward_forward.1} parent=1 // pred_fallthru
      _
    // Predicated region
    $region34: #{reasoning_reward_forward.1} parent=1 // pred_check
      _
    $region35: #{reasoning_reward_forward.1} parent=1 // pred_check_branch
      %46 = sbr.rel (0) target = $region37
    $region36: #{reasoning_reward_forward.1} parent=1 // pred_region
      _
    $region37: #{reasoning_reward_forward.1} parent=1 // pred_fallthru
      _
    // Predicated region
    $region38: #{reasoning_reward_forward.1} parent=1 // pred_check
      _
    $region39: #{reasoning_reward_forward.1} parent=1 // pred_check_branch
      %48 = sbr.rel (0) target = $region41
    $region40: #{reasoning_reward_forward.1} parent=1 // pred_region
      _
    $region41: #{reasoning_reward_forward.1} parent=1 // pred_fallthru
      _
    // Predicated region
    $region42: #{reasoning_reward_forward.1} parent=1 // pred_check
      _
    $region43: #{reasoning_reward_forward.1} parent=1 // pred_check_branch
      %50 = sbr.rel (0) target = $region45
    $region44: #{reasoning_reward_forward.1} parent=1 // pred_region
      %s52 = ssub.s32 1024, 1024
      %53 = vsyncadd [#allocation8], %s52
      %s54 = sshll.u32 [#allocation7], 4
      %s55 = int_to_ptr.vmem [resolvable:$true] %s54
      %60 = dma.hbm_to_vmem [thread:$0]  %s10, 1024, %s55, [#allocation8], 64, 64, 4
    $region45: #{reasoning_reward_forward.1} parent=1 // pred_fallthru
      _
    // Predicated region
    $region46: #{reasoning_reward_forward.1} parent=1 // pred_check
      _
    $region47: #{reasoning_reward_forward.1} parent=1 // pred_check_branch
      %62 = sbr.rel (0) target = $region49
    $region48: #{reasoning_reward_forward.1} parent=1 // pred_region
      _
    $region49: #{reasoning_reward_forward.1} parent=1 // pred_fallthru
      _
    // Predicated region
    $region50: #{reasoning_reward_forward.1} parent=1 // pred_check
      _
    $region51: #{reasoning_reward_forward.1} parent=1 // pred_check_branch
      %64 = sbr.rel (0) target = $region53
    $region52: #{reasoning_reward_forward.1} parent=1 // pred_region
      _
    $region53: #{reasoning_reward_forward.1} parent=1 // pred_fallthru
      _
    // Predicated region
    $region54: #{reasoning_reward_forward.1} parent=1 // pred_check
      _
    $region55: #{reasoning_reward_forward.1} parent=1 // pred_check_branch
      %66 = sbr.rel (0) target = $region57
    $region56: #{reasoning_reward_forward.1} parent=1 // pred_region
      _
    $region57: #{reasoning_reward_forward.1} parent=1 // pred_fallthru
      _
    // Predicated region
    $region58: #{reasoning_reward_forward.1} parent=1 // pred_check
      _
    $region59: #{reasoning_reward_forward.1} parent=1 // pred_check_branch
      %68 = sbr.rel (0) target = $region61
    $region60: #{reasoning_reward_forward.1} parent=1 // pred_region
      %s70 = ssub.s32 1024, 1024
      %71 = vsyncadd [#allocation10], %s70
      %s72 = sshll.u32 [#allocation9], 4
      %s73 = int_to_ptr.vmem [resolvable:$true] %s72
      %78 = dma.hbm_to_vmem [thread:$0]  %s14, 1024, %s73, [#allocation10], 64, 64, 4
    $region61: #{reasoning_reward_forward.1} parent=1 // pred_fallthru
      _
    // Predicated region
    $region62: #{reasoning_reward_forward.1} parent=1 // pred_check
      _
    $region63: #{reasoning_reward_forward.1} parent=1 // pred_check_branch
      %80 = sbr.rel (0) target = $region65
    $region64: #{reasoning_reward_forward.1} parent=1 // pred_region
      _
    $region65: #{reasoning_reward_forward.1} parent=1 // pred_fallthru
      _
    // Predicated region
    $region66: #{reasoning_reward_forward.1} parent=1 // pred_check
      _
    $region67: #{reasoning_reward_forward.1} parent=1 // pred_check_branch
      %82 = sbr.rel (0) target = $region69
    $region68: #{reasoning_reward_forward.1} parent=1 // pred_region
      %s84 = ssub.s32 1024, 1024
      %85 = vsyncadd [#allocation10], %s84
      %s86 = sshll.u32 [#allocation11], 4
      %s87 = int_to_ptr.vmem [resolvable:$true] %s86
      %92 = dma.hbm_to_vmem [thread:$0]  %s16, 1024, %s87, [#allocation10], 64, 64, 4
    $region69: #{reasoning_reward_forward.1} parent=1 // pred_fallthru
      _
    // Predicated region
    $region70: #{reasoning_reward_forward.1} parent=1 // pred_check
      _
    $region71: #{reasoning_reward_forward.1} parent=1 // pred_check_branch
      %94 = sbr.rel (0) target = $region73
    $region72: #{reasoning_reward_forward.1} parent=1 // pred_region
      _
    $region73: #{reasoning_reward_forward.1} parent=1 // pred_fallthru
      _
    // Predicated region
    $region74: #{reasoning_reward_forward.1} parent=1 // pred_check
      _
    $region75: #{reasoning_reward_forward.1} parent=1 // pred_check_branch
      %96 = sbr.rel (0) target = $region77
    $region76: #{reasoning_reward_forward.1} parent=1 // pred_region
      _
    $region77: #{reasoning_reward_forward.1} parent=1 // pred_fallthru
      _
    // Predicated region
    $region78: #{reasoning_reward_forward.1} parent=1 // pred_check
      _
    $region79: #{reasoning_reward_forward.1} parent=1 // pred_check_branch
      %98 = sbr.rel (0) target = $region81
    $region80: #{reasoning_reward_forward.1} parent=1 // pred_region
      _
    $region81: #{reasoning_reward_forward.1} parent=1 // pred_fallthru
      _
    // Predicated region
    $region82: #{reasoning_reward_forward.1} parent=1 // pred_check
      _
    $region83: #{reasoning_reward_forward.1} parent=1 // pred_check_branch
      %100 = sbr.rel (0) target = $region85
    $region84: #{reasoning_reward_forward.1} parent=1 // pred_region
      %101 = dma.done [#allocation8], 1024
    $region85: #{reasoning_reward_forward.1} parent=1 // pred_fallthru
      _
    // Predicated region
    $region86: #{reasoning_reward_forward.1} parent=1 // pred_check
      _
    $region87: #{reasoning_reward_forward.1} parent=1 // pred_check_branch
      %103 = sbr.rel (0) target = $region89
    $region88: #{reasoning_reward_forward.1} parent=1 // pred_region
      %104 = dma.done [#allocation10], 1024
    $region89: #{reasoning_reward_forward.1} parent=1 // pred_fallthru
      _
    // Predicated region
    $region90: #{reasoning_reward_forward.1} parent=1 // pred_check
      _
    $region91: #{reasoning_reward_forward.1} parent=1 // pred_check_branch
      %106 = sbr.rel (0) target = $region93
    $region92: #{reasoning_reward_forward.1} parent=1 // pred_region
      %107 = dma.done [#allocation10], 1024
    $region93: #{reasoning_reward_forward.1} parent=1 // pred_fallthru
      _
    %p109 = scmp.eq.s32.totalorder 0, 0
    // Predicated region
    $region94: #{reasoning_reward_forward.1} parent=1 // pred_check
      %p110 = pneg %p109
    $region95: #{reasoning_reward_forward.1} parent=1 // pred_check_branch
      %112 = sbr.rel (%p110) target = $region97
    $region96: #{reasoning_reward_forward.1} parent=1 // pred_region
      %v113 = vld [vmem:[%s1] sm:$0xf]
      %v114 = vunpack.c.l.bf16 %v113
      %115 = vadd.xlane.f32.xlu0 %v114
      %v116 = vpop.xlane.xlu0 %115
      %v117 = vmul.f32 %v116, 0.03125
      %v118 = vmul.f32 %v114, %v114
      %119 = vadd.xlane.f32.xlu0 %v118
      %v120 = vpop.xlane.xlu0 %119
      %v121 = vmul.f32 %v120, 0.03125
      %v122 = vmul.f32 %v117, %v117
      %v123 = vsub.f32 %v121, %v122
      %v124 = vsub.f32 %v114, %v117
      %v125 = vadd.f32 %v123, 1e-05
      %v126 = vrsqrt.pop %v125
      %v127 = vmul.f32 %v124, %v126
      %v128 = vld [vmem:[%s3] sm:$0x1]
      %v130 = vlaneseq
      %v131 = vshrl.u32 %v130, 7
      %v132 = vsub.s32 0, %v131
      %v133 = vrot.slane %v128, %v132
      %v135 = vmul.f32 %v127, %v133
      %v136 = vld [vmem:[%s4] sm:$0x1]
      %v138 = vlaneseq
      %v139 = vshrl.u32 %v138, 7
      %v140 = vsub.s32 0, %v139
      %v141 = vrot.slane %v136, %v140
      %v143 = vadd.f32 %v135, %v141
      %v144 = vpack.c.bf16 %v143, %v143
      %v145 = vld [vmem:[%s5] sm:$0xf]
      %v146 = vld [vmem:[%s5 + $0x4] sm:$0xf]
      %v147 = vld [vmem:[%s5 + $0x8] sm:$0xf]
      %v148 = vld [vmem:[%s5 + $0xc] sm:$0xf]
      %v149 = vld [vmem:[%s5 + $0x10] sm:$0xf]
      %v150 = vld [vmem:[%s5 + $0x14] sm:$0xf]
      %v151 = vld [vmem:[%s5 + $0x18] sm:$0xf]
      %v152 = vld [vmem:[%s5 + $0x1c] sm:$0xf]
      %v153 = vld [vmem:[%s5 + $0x20] sm:$0xf]
      %v154 = vld [vmem:[%s5 + $0x24] sm:$0xf]
      %v155 = vld [vmem:[%s5 + $0x28] sm:$0xf]
      %v156 = vld [vmem:[%s5 + $0x2c] sm:$0xf]
      %v157 = vld [vmem:[%s5 + $0x30] sm:$0xf]
      %v158 = vld [vmem:[%s5 + $0x34] sm:$0xf]
      %v159 = vld [vmem:[%s5 + $0x38] sm:$0xf]
      %v160 = vld [vmem:[%s5 + $0x3c] sm:$0xf]
      %v161 = vld [vmem:[%s6] sm:$0x1]
      %v163 = vlaneseq
      %v164 = vshrl.u32 %v163, 7
      %v165 = vsub.s32 0, %v164
      %v166 = vrot.slane %v161, %v165
      %v184 = vunpack.c.l.b16 %v145
      %v185 = vunpack.c.l.b16 %v146
      %v186 = vunpack.c.l.b16 %v147
      %v187 = vunpack.c.l.b16 %v148
      %v188 = vunpack.c.l.b16 %v149
      %v189 = vunpack.c.l.b16 %v150
      %v190 = vunpack.c.l.b16 %v151
      %v191 = vunpack.c.l.b16 %v152
      %v192 = vunpack.c.l.b16 %v153
      %v193 = vunpack.c.l.b16 %v154
      %v194 = vunpack.c.l.b16 %v155
      %v195 = vunpack.c.l.b16 %v156
      %v196 = vunpack.c.l.b16 %v157
      %v197 = vunpack.c.l.b16 %v158
      %v198 = vunpack.c.l.b16 %v159
      %v199 = vunpack.c.l.b16 %v160
      %v200 = vpack.c.b16 %v185, %v184
      %v201 = vpack.c.b16 %v187, %v186
      %v202 = vpack.c.b16 %v189, %v188
      %v203 = vpack.c.b16 %v191, %v190
      %v204 = vpack.c.b16 %v193, %v192
      %v205 = vpack.c.b16 %v195, %v194
      %v206 = vpack.c.b16 %v197, %v196
      %v207 = vpack.c.b16 %v199, %v198
      %216 = vmatprep.subr.bf16.mxu0 0
      %217 = vmatpush1.bf16.msra.mxu0 %v200
      %218 = vmatprep.subr.bf16.mxu0 0
      %219 = vmatpush1.bf16.msra.mxu0 %v201
      %220 = vmatprep.subr.bf16.mxu0 0
      %221 = vmatpush1.bf16.msra.mxu0 %v202
      %222 = vmatprep.subr.bf16.mxu0 0
      %223 = vmatpush1.bf16.msra.mxu0 %v203
      %224 = vmatprep.subr.bf16.mxu0 0
      %225 = vmatpush1.bf16.msra.mxu0 %v204
      %226 = vmatprep.subr.bf16.mxu0 0
      %227 = vmatpush1.bf16.msra.mxu0 %v205
      %228 = vmatprep.subr.bf16.mxu0 0
      %229 = vmatpush1.bf16.msra.mxu0 %v206
      %230 = vmatprep.subr.bf16.mxu0 0
      %231 = vmatpush1.bf16.msra.mxu0 %v207
      %232 = vmatprep.subr.bf16.mxu0 0
      %233 = vmatpush1.bf16.msra.mxu0 0
      %234 = vmatprep.subr.bf16.mxu0 0
      %235 = vmatpush1.bf16.msra.mxu0 0
      %236 = vmatprep.subr.bf16.mxu0 0
      %237 = vmatpush1.bf16.msra.mxu0 0
      %238 = vmatprep.subr.bf16.mxu0 0
      %239 = vmatpush1.bf16.msra.mxu0 0
      %240 = vmatprep.subr.bf16.mxu0 0
      %241 = vmatpush1.bf16.msra.mxu0 0
      %242 = vmatprep.subr.bf16.mxu0 0
      %243 = vmatpush1.bf16.msra.mxu0 0
      %244 = vmatprep.subr.bf16.mxu0 0
      %245 = vmatpush1.bf16.msra.mxu0 0
      %246 = vmatprep.subr.bf16.mxu0 0
      %247 = vmatpush1.bf16.msra.mxu0 0
      %248 = vmatprep.mubr.bf16.mxu0 0
      %249 = vmatmul.mubr.bf16.gmra.mrb[0].mxu0 %v144
      %v250 = vpop.f32.mrb[0].mxu0
      %v251 = vadd.f32 %v166, %v250
      %v252 = vpop.f32.mrb[0].mxu0
      %v253 = vpop.f32.mrb[0].mxu0
      %v254 = vpop.f32.mrb[0].mxu0
      %255 = vdwg.mxu0
      %v256 = vpack.c.bf16 %v251, %v251
      %v257 = vld [vmem:[%s7] sm:$0xf]
      %v258 = vld [vmem:[%s7 + $0x4] sm:$0xf]
      %v259 = vld [vmem:[%s7 + $0x8] sm:$0xf]
      %v260 = vld [vmem:[%s7 + $0xc] sm:$0xf]
      %v261 = vld [vmem:[%s7 + $0x10] sm:$0xf]
      %v262 = vld [vmem:[%s7 + $0x14] sm:$0xf]
      %v263 = vld [vmem:[%s7 + $0x18] sm:$0xf]
      %v264 = vld [vmem:[%s7 + $0x1c] sm:$0xf]
      %v265 = vld [vmem:[%s7 + $0x20] sm:$0xf]
      %v266 = vld [vmem:[%s7 + $0x24] sm:$0xf]
      %v267 = vld [vmem:[%s7 + $0x28] sm:$0xf]
      %v268 = vld [vmem:[%s7 + $0x2c] sm:$0xf]
      %v269 = vld [vmem:[%s7 + $0x30] sm:$0xf]
      %v270 = vld [vmem:[%s7 + $0x34] sm:$0xf]
      %v271 = vld [vmem:[%s7 + $0x38] sm:$0xf]
      %v272 = vld [vmem:[%s7 + $0x3c] sm:$0xf]
      %v289 = vunpack.c.l.b16 %v257
      %v290 = vunpack.c.l.b16 %v258
      %v291 = vunpack.c.l.b16 %v259
      %v292 = vunpack.c.l.b16 %v260
      %v293 = vunpack.c.l.b16 %v261
      %v294 = vunpack.c.l.b16 %v262
      %v295 = vunpack.c.l.b16 %v263
      %v296 = vunpack.c.l.b16 %v264
      %v297 = vunpack.c.l.b16 %v265
      %v298 = vunpack.c.l.b16 %v266
      %v299 = vunpack.c.l.b16 %v267
      %v300 = vunpack.c.l.b16 %v268
      %v301 = vunpack.c.l.b16 %v269
      %v302 = vunpack.c.l.b16 %v270
      %v303 = vunpack.c.l.b16 %v271
      %v304 = vunpack.c.l.b16 %v272
      %v305 = vpack.c.b16 %v290, %v289
      %v306 = vpack.c.b16 %v292, %v291
      %v307 = vpack.c.b16 %v294, %v293
      %v308 = vpack.c.b16 %v296, %v295
      %v309 = vpack.c.b16 %v298, %v297
      %v310 = vpack.c.b16 %v300, %v299
      %v311 = vpack.c.b16 %v302, %v301
      %v312 = vpack.c.b16 %v304, %v303
      %321 = vmatprep.subr.bf16.mxu0 0
      %322 = vmatpush1.bf16.msra.mxu0 %v305
      %323 = vmatprep.subr.bf16.mxu0 0
      %324 = vmatpush1.bf16.msra.mxu0 %v306
      %325 = vmatprep.subr.bf16.mxu0 0
      %326 = vmatpush1.bf16.msra.mxu0 %v307
      %327 = vmatprep.subr.bf16.mxu0 0
      %328 = vmatpush1.bf16.msra.mxu0 %v308
      %329 = vmatprep.subr.bf16.mxu0 0
      %330 = vmatpush1.bf16.msra.mxu0 %v309
      %331 = vmatprep.subr.bf16.mxu0 0
      %332 = vmatpush1.bf16.msra.mxu0 %v310
      %333 = vmatprep.subr.bf16.mxu0 0
      %334 = vmatpush1.bf16.msra.mxu0 %v311
      %335 = vmatprep.subr.bf16.mxu0 0
      %336 = vmatpush1.bf16.msra.mxu0 %v312
      %337 = vmatprep.subr.bf16.mxu0 0
      %338 = vmatpush1.bf16.msra.mxu0 0
      %339 = vmatprep.subr.bf16.mxu0 0
      %340 = vmatpush1.bf16.msra.mxu0 0
      %341 = vmatprep.subr.bf16.mxu0 0
      %342 = vmatpush1.bf16.msra.mxu0 0
      %343 = vmatprep.subr.bf16.mxu0 0
      %344 = vmatpush1.bf16.msra.mxu0 0
      %345 = vmatprep.subr.bf16.mxu0 0
      %346 = vmatpush1.bf16.msra.mxu0 0
      %347 = vmatprep.subr.bf16.mxu0 0
      %348 = vmatpush1.bf16.msra.mxu0 0
      %349 = vmatprep.subr.bf16.mxu0 0
      %350 = vmatpush1.bf16.msra.mxu0 0
      %351 = vmatprep.subr.bf16.mxu0 0
      %352 = vmatpush1.bf16.msra.mxu0 0
      %353 = vmatprep.mubr.bf16.mxu0 0
      %354 = vmatmul.mubr.bf16.gmra.mrb[0].mxu0 %v256
      %v355 = vpop.f32.mrb[0].mxu0
      %v356 = vadd.f32 0.0, %v355
      %v357 = vpop.f32.mrb[0].mxu0
      %v358 = vpop.f32.mrb[0].mxu0
      %v359 = vpop.f32.mrb[0].mxu0
      %360 = vdwg.mxu0
      %v361 = vmul.f32 %v356, 0.17677669
      %362 = vst [vmem:[#allocation2] sm:$0xff] %v361
      %vm363 = vcmask 7168
      %364 = vst.msk [vmem:[#allocation3] sm:$0xff] %vm363, -1e+30
      %365 = vst.msk [vmem:[#allocation4] sm:$0xff] %vm363, 0.0
      %366 = vst [vmem:[#allocation5] sm:$0xff] 0.0
    $region97: #{reasoning_reward_forward.1} parent=1 // pred_fallthru
      _
    %v367 = vld [vmem:[%s0] sm:$0xf]
    %v368 = vld [vmem:[%s0 + $0x4] sm:$0xf]
    %v369 = vld [vmem:[%s0 + $0x8] sm:$0xf]
    %v370 = vld [vmem:[%s0 + $0xc] sm:$0xf]
    %v371 = vld [vmem:[%s0 + $0x10] sm:$0xf]
    %v372 = vld [vmem:[%s0 + $0x14] sm:$0xf]
    %v373 = vld [vmem:[%s0 + $0x18] sm:$0xf]
    %v374 = vld [vmem:[%s0 + $0x1c] sm:$0xf]
    %v375 = vunpack.c.l.bf16 %v367
    %v376 = vunpack.c.l.bf16 %v368
    %v377 = vunpack.c.l.bf16 %v369
    %v378 = vunpack.c.l.bf16 %v370
    %v379 = vunpack.c.l.bf16 %v371
    %v380 = vunpack.c.l.bf16 %v372
    %v381 = vunpack.c.l.bf16 %v373
    %v382 = vunpack.c.l.bf16 %v374
    %383 = vadd.xlane.f32.xlu0 %v375
    %v384 = vpop.xlane.xlu0 %383
    %385 = vadd.xlane.f32.xlu0 %v376
    %v386 = vpop.xlane.xlu0 %385
    %387 = vadd.xlane.f32.xlu0 %v377
    %v388 = vpop.xlane.xlu0 %387
    %389 = vadd.xlane.f32.xlu0 %v378
    %v390 = vpop.xlane.xlu0 %389
    %391 = vadd.xlane.f32.xlu0 %v379
    %v392 = vpop.xlane.xlu0 %391
    %393 = vadd.xlane.f32.xlu0 %v380
    %v394 = vpop.xlane.xlu0 %393
    %395 = vadd.xlane.f32.xlu0 %v381
    %v396 = vpop.xlane.xlu0 %395
    %397 = vadd.xlane.f32.xlu0 %v382
    %v398 = vpop.xlane.xlu0 %397
    %v399 = vmul.f32 %v384, 0.03125
    %v400 = vmul.f32 %v386, 0.03125
    %v401 = vmul.f32 %v388, 0.03125
    %v402 = vmul.f32 %v390, 0.03125
    %v403 = vmul.f32 %v392, 0.03125
    %v404 = vmul.f32 %v394, 0.03125
    %v405 = vmul.f32 %v396, 0.03125
    %v406 = vmul.f32 %v398, 0.03125
    %v407 = vmul.f32 %v375, %v375
    %v408 = vmul.f32 %v376, %v376
    %v409 = vmul.f32 %v377, %v377
    %v410 = vmul.f32 %v378, %v378
    %v411 = vmul.f32 %v379, %v379
    %v412 = vmul.f32 %v380, %v380
    %v413 = vmul.f32 %v381, %v381
    %v414 = vmul.f32 %v382, %v382
    %415 = vadd.xlane.f32.xlu0 %v407
    %v416 = vpop.xlane.xlu0 %415
    %417 = vadd.xlane.f32.xlu0 %v408
    %v418 = vpop.xlane.xlu0 %417
    %419 = vadd.xlane.f32.xlu0 %v409
    %v420 = vpop.xlane.xlu0 %419
    %421 = vadd.xlane.f32.xlu0 %v410
    %v422 = vpop.xlane.xlu0 %421
    %423 = vadd.xlane.f32.xlu0 %v411
    %v424 = vpop.xlane.xlu0 %423
    %425 = vadd.xlane.f32.xlu0 %v412
    %v426 = vpop.xlane.xlu0 %425
    %427 = vadd.xlane.f32.xlu0 %v413
    %v428 = vpop.xlane.xlu0 %427
    %429 = vadd.xlane.f32.xlu0 %v414
    %v430 = vpop.xlane.xlu0 %429
    %v431 = vmul.f32 %v416, 0.03125
    %v432 = vmul.f32 %v418, 0.03125
    %v433 = vmul.f32 %v420, 0.03125
    %v434 = vmul.f32 %v422, 0.03125
    %v435 = vmul.f32 %v424, 0.03125
    %v436 = vmul.f32 %v426, 0.03125
    %v437 = vmul.f32 %v428, 0.03125
    %v438 = vmul.f32 %v430, 0.03125
    %v439 = vmul.f32 %v399, %v399
    %v440 = vmul.f32 %v400, %v400
    %v441 = vmul.f32 %v401, %v401
    %v442 = vmul.f32 %v402, %v402
    %v443 = vmul.f32 %v403, %v403
    %v444 = vmul.f32 %v404, %v404
    %v445 = vmul.f32 %v405, %v405
    %v446 = vmul.f32 %v406, %v406
    %v447 = vsub.f32 %v431, %v439
    %v448 = vsub.f32 %v432, %v440
    %v449 = vsub.f32 %v433, %v441
    %v450 = vsub.f32 %v434, %v442
    %v451 = vsub.f32 %v435, %v443
    %v452 = vsub.f32 %v436, %v444
    %v453 = vsub.f32 %v437, %v445
    %v454 = vsub.f32 %v438, %v446
    %v455 = vsub.f32 %v375, %v399
    %v456 = vsub.f32 %v376, %v400
    %v457 = vsub.f32 %v377, %v401
    %v458 = vsub.f32 %v378, %v402
    %v459 = vsub.f32 %v379, %v403
    %v460 = vsub.f32 %v380, %v404
    %v461 = vsub.f32 %v381, %v405
    %v462 = vsub.f32 %v382, %v406
    %v463 = vadd.f32 %v447, 1e-05
    %v464 = vadd.f32 %v448, 1e-05
    %v465 = vadd.f32 %v449, 1e-05
    %v466 = vadd.f32 %v450, 1e-05
    %v467 = vadd.f32 %v451, 1e-05
    %v468 = vadd.f32 %v452, 1e-05
    %v469 = vadd.f32 %v453, 1e-05
    %v470 = vadd.f32 %v454, 1e-05
    %v471 = vrsqrt.pop %v463
    %v472 = vrsqrt.pop %v464
    %v473 = vrsqrt.pop %v465
    %v474 = vrsqrt.pop %v466
    %v475 = vrsqrt.pop %v467
    %v476 = vrsqrt.pop %v468
    %v477 = vrsqrt.pop %v469
    %v478 = vrsqrt.pop %v470
    %v479 = vmul.f32 %v455, %v471
    %v480 = vmul.f32 %v456, %v472
    %v481 = vmul.f32 %v457, %v473
    %v482 = vmul.f32 %v458, %v474
    %v483 = vmul.f32 %v459, %v475
    %v484 = vmul.f32 %v460, %v476
    %v485 = vmul.f32 %v461, %v477
    %v486 = vmul.f32 %v462, %v478
    %v487 = vld [vmem:[%s3] sm:$0x1]
    %v489 = vlaneseq
    %v490 = vshrl.u32 %v489, 7
    %v491 = vsub.s32 0, %v490
    %v492 = vrot.slane %v487, %v491
    %v494 = vmul.f32 %v479, %v492
    %v495 = vmul.f32 %v480, %v492
    %v496 = vmul.f32 %v481, %v492
    %v497 = vmul.f32 %v482, %v492
    %v498 = vmul.f32 %v483, %v492
    %v499 = vmul.f32 %v484, %v492
    %v500 = vmul.f32 %v485, %v492
    %v501 = vmul.f32 %v486, %v492
    %v502 = vld [vmem:[%s4] sm:$0x1]
    %v504 = vlaneseq
    %v505 = vshrl.u32 %v504, 7
    %v506 = vsub.s32 0, %v505
    %v507 = vrot.slane %v502, %v506
    %v509 = vadd.f32 %v494, %v507
    %v510 = vadd.f32 %v495, %v507
    %v511 = vadd.f32 %v496, %v507
    %v512 = vadd.f32 %v497, %v507
    %v513 = vadd.f32 %v498, %v507
    %v514 = vadd.f32 %v499, %v507
    %v515 = vadd.f32 %v500, %v507
    %v516 = vadd.f32 %v501, %v507
    %v517 = vpack.c.bf16 %v509, %v509
    %v518 = vpack.c.bf16 %v510, %v510
    %v519 = vpack.c.bf16 %v511, %v511
    %v520 = vpack.c.bf16 %v512, %v512
    %v521 = vpack.c.bf16 %v513, %v513
    %v522 = vpack.c.bf16 %v514, %v514
    %v523 = vpack.c.bf16 %v515, %v515
    %v524 = vpack.c.bf16 %v516, %v516
    %v525 = vld [vmem:[#allocation2] sm:$0xff]
    %v526 = vpack.c.bf16 %v525, %v525
    %v529 = vunpack.c.l.s4 1966171168
    %v530 = vunpack.c.0.s8 %v529
    %v531 = vlaneseq
    %v532 = vshrl.u32 %v531, 7
    %v533 = vsub.s32 %v530, %v532
    %v534 = vrot.slane %v526, %v533
    %v535 = vcombine.high %v534, %v534
    %v537 = vunpack.c.l.s4 1966171168
    %v538 = vunpack.c.0.s8 %v537
    %v539 = vlaneseq
    %v540 = vshrl.u32 %v539, 7
    %v541 = vsub.s32 %v538, %v540
    %v542 = vrot.slane %v534, %v541
    %v544 = vunpack.c.l.s4 1966171168
    %v545 = vunpack.c.0.s8 %v544
    %v546 = vlaneseq
    %v547 = vshrl.u32 %v546, 7
    %v548 = vsub.s32 %v545, %v547
    %v549 = vrot.slane %v535, %v548
    %v550 = vcombine.high %v542, %v542
    %v551 = vcombine.high %v549, %v549
    %v552 = vunpack.i.l.s16 %v542
    %v553 = vunpack.i.h.s16 %v542
    %v554 = vunpack.i.l.s16 %v549
    %v555 = vunpack.i.h.s16 %v549
    %v556 = vunpack.i.l.s16 %v550
    %v557 = vunpack.i.h.s16 %v550
    %v558 = vunpack.i.l.s16 %v551
    %v559 = vunpack.i.h.s16 %v551
    %v560 = vpack.i.b16 %v552, %v552
    %v561 = vlaneseq
    %v562 = vshrl.u32 %v561, 7
    %v563 = vsub.s32 0, %v562
    %v564 = vrot.slane %v560, %v563
    %566 = vmatprep.subr.bf16.mxu0 0
    %567 = vmatpush1.bf16.xpose.msra.mxu0 %v517
    %568 = vmatprep.subr.bf16.mxu0 0
    %569 = vmatpush1.bf16.xpose.msra.mxu0 0
    %570 = vmatprep.subr.bf16.mxu0 0
    %571 = vmatpush1.bf16.xpose.msra.mxu0 0
    %572 = vmatprep.subr.bf16.mxu0 0
    %573 = vmatpush1.bf16.xpose.msra.mxu0 0
    %574 = vmatprep.subr.bf16.mxu0 0
    %575 = vmatpush1.bf16.xpose.msra.mxu0 0
    %576 = vmatprep.subr.bf16.mxu0 0
    %577 = vmatpush1.bf16.xpose.msra.mxu0 0
    %578 = vmatprep.subr.bf16.mxu0 0
    %579 = vmatpush1.bf16.xpose.msra.mxu0 0
    %580 = vmatprep.subr.bf16.mxu0 0
    %581 = vmatpush1.bf16.xpose.msra.mxu0 0
    %582 = vmatprep.subr.bf16.mxu0 0
    %583 = vmatpush1.bf16.xpose.msra.mxu0 0
    %584 = vmatprep.subr.bf16.mxu0 0
    %585 = vmatpush1.bf16.xpose.msra.mxu0 0
    %586 = vmatprep.subr.bf16.mxu0 0
    %587 = vmatpush1.bf16.xpose.msra.mxu0 0
    %588 = vmatprep.subr.bf16.mxu0 0
    %589 = vmatpush1.bf16.xpose.msra.mxu0 0
    %590 = vmatprep.subr.bf16.mxu0 0
    %591 = vmatpush1.bf16.xpose.msra.mxu0 0
    %592 = vmatprep.subr.bf16.mxu0 0
    %593 = vmatpush1.bf16.xpose.msra.mxu0 0
    %594 = vmatprep.subr.bf16.mxu0 0
    %595 = vmatpush1.bf16.xpose.msra.mxu0 0
    %596 = vmatprep.subr.bf16.mxu0 0
    %597 = vmatpush1.bf16.xpose.msra.mxu0 0
    %598 = vmatprep.mubr.bf16.mxu0 0
    %599 = vmatmul.mubr.bf16.gmra.mrb[0].mxu0 %v564
    %v600 = vpop.f32.mrb[0].mxu0
    %v601 = vadd.f32 0.0, %v600
    %v602 = vpop.f32.mrb[0].mxu0
    %v603 = vpop.f32.mrb[0].mxu0
    %v604 = vpop.f32.mrb[0].mxu0
    %605 = vdwg.mxu0
    %v606 = vpack.i.b16 %v553, %v553
    %v607 = vlaneseq
    %v608 = vshrl.u32 %v607, 7
    %v609 = vsub.s32 0, %v608
    %v610 = vrot.slane %v606, %v609
    %612 = vmatprep.subr.bf16.mxu0 0
    %613 = vmatpush1.bf16.xpose.msra.mxu0 %v518
    %614 = vmatprep.subr.bf16.mxu0 0
    %615 = vmatpush1.bf16.xpose.msra.mxu0 0
    %616 = vmatprep.subr.bf16.mxu0 0
    %617 = vmatpush1.bf16.xpose.msra.mxu0 0
    %618 = vmatprep.subr.bf16.mxu0 0
    %619 = vmatpush1.bf16.xpose.msra.mxu0 0
    %620 = vmatprep.subr.bf16.mxu0 0
    %621 = vmatpush1.bf16.xpose.msra.mxu0 0
    %622 = vmatprep.subr.bf16.mxu0 0
    %623 = vmatpush1.bf16.xpose.msra.mxu0 0
    %624 = vmatprep.subr.bf16.mxu0 0
    %625 = vmatpush1.bf16.xpose.msra.mxu0 0
    %626 = vmatprep.subr.bf16.mxu0 0
    %627 = vmatpush1.bf16.xpose.msra.mxu0 0
    %628 = vmatprep.subr.bf16.mxu0 0
    %629 = vmatpush1.bf16.xpose.msra.mxu0 0
    %630 = vmatprep.subr.bf16.mxu0 0
    %631 = vmatpush1.bf16.xpose.msra.mxu0 0
    %632 = vmatprep.subr.bf16.mxu0 0
    %633 = vmatpush1.bf16.xpose.msra.mxu0 0
    %634 = vmatprep.subr.bf16.mxu0 0
    %635 = vmatpush1.bf16.xpose.msra.mxu0 0
    %636 = vmatprep.subr.bf16.mxu0 0
    %637 = vmatpush1.bf16.xpose.msra.mxu0 0
    %638 = vmatprep.subr.bf16.mxu0 0
    %639 = vmatpush1.bf16.xpose.msra.mxu0 0
    %640 = vmatprep.subr.bf16.mxu0 0
    %641 = vmatpush1.bf16.xpose.msra.mxu0 0
    %642 = vmatprep.subr.bf16.mxu0 0
    %643 = vmatpush1.bf16.xpose.msra.mxu0 0
    %644 = vmatprep.mubr.bf16.mxu0 0
    %645 = vmatmul.mubr.bf16.gmra.mrb[0].mxu0 %v610
    %v646 = vpop.f32.mrb[0].mxu0
    %v647 = vadd.f32 0.0, %v646
    %v648 = vpop.f32.mrb[0].mxu0
    %v649 = vpop.f32.mrb[0].mxu0
    %v650 = vpop.f32.mrb[0].mxu0
    %651 = vdwg.mxu0
    %v652 = vpack.i.b16 %v554, %v554
    %v653 = vlaneseq
    %v654 = vshrl.u32 %v653, 7
    %v655 = vsub.s32 0, %v654
    %v656 = vrot.slane %v652, %v655
    %658 = vmatprep.subr.bf16.mxu0 0
    %659 = vmatpush1.bf16.xpose.msra.mxu0 %v519
    %660 = vmatprep.subr.bf16.mxu0 0
    %661 = vmatpush1.bf16.xpose.msra.mxu0 0
    %662 = vmatprep.subr.bf16.mxu0 0
    %663 = vmatpush1.bf16.xpose.msra.mxu0 0
    %664 = vmatprep.subr.bf16.mxu0 0
    %665 = vmatpush1.bf16.xpose.msra.mxu0 0
    %666 = vmatprep.subr.bf16.mxu0 0
    %667 = vmatpush1.bf16.xpose.msra.mxu0 0
    %668 = vmatprep.subr.bf16.mxu0 0
    %669 = vmatpush1.bf16.xpose.msra.mxu0 0
    %670 = vmatprep.subr.bf16.mxu0 0
    %671 = vmatpush1.bf16.xpose.msra.mxu0 0
    %672 = vmatprep.subr.bf16.mxu0 0
    %673 = vmatpush1.bf16.xpose.msra.mxu0 0
    %674 = vmatprep.subr.bf16.mxu0 0
    %675 = vmatpush1.bf16.xpose.msra.mxu0 0
    %676 = vmatprep.subr.bf16.mxu0 0
    %677 = vmatpush1.bf16.xpose.msra.mxu0 0
    %678 = vmatprep.subr.bf16.mxu0 0
    %679 = vmatpush1.bf16.xpose.msra.mxu0 0
    %680 = vmatprep.subr.bf16.mxu0 0
    %681 = vmatpush1.bf16.xpose.msra.mxu0 0
    %682 = vmatprep.subr.bf16.mxu0 0
    %683 = vmatpush1.bf16.xpose.msra.mxu0 0
    %684 = vmatprep.subr.bf16.mxu0 0
    %685 = vmatpush1.bf16.xpose.msra.mxu0 0
    %686 = vmatprep.subr.bf16.mxu0 0
    %687 = vmatpush1.bf16.xpose.msra.mxu0 0
    %688 = vmatprep.subr.bf16.mxu0 0
    %689 = vmatpush1.bf16.xpose.msra.mxu0 0
    %690 = vmatprep.mubr.bf16.mxu0 0
    %691 = vmatmul.mubr.bf16.gmra.mrb[0].mxu0 %v656
    %v692 = vpop.f32.mrb[0].mxu0
    %v693 = vadd.f32 0.0, %v692
    %v694 = vpop.f32.mrb[0].mxu0
    %v695 = vpop.f32.mrb[0].mxu0
    %v696 = vpop.f32.mrb[0].mxu0
    %697 = vdwg.mxu0
    %v698 = vpack.i.b16 %v555, %v555
    %v699 = vlaneseq
    %v700 = vshrl.u32 %v699, 7
    %v701 = vsub.s32 0, %v700
    %v702 = vrot.slane %v698, %v701
    %704 = vmatprep.subr.bf16.mxu0 0
    %705 = vmatpush1.bf16.xpose.msra.mxu0 %v520
    %706 = vmatprep.subr.bf16.mxu0 0
    %707 = vmatpush1.bf16.xpose.msra.mxu0 0
    %708 = vmatprep.subr.bf16.mxu0 0
    %709 = vmatpush1.bf16.xpose.msra.mxu0 0
    %710 = vmatprep.subr.bf16.mxu0 0
    %711 = vmatpush1.bf16.xpose.msra.mxu0 0
    %712 = vmatprep.subr.bf16.mxu0 0
    %713 = vmatpush1.bf16.xpose.msra.mxu0 0
    %714 = vmatprep.subr.bf16.mxu0 0
    %715 = vmatpush1.bf16.xpose.msra.mxu0 0
    %716 = vmatprep.subr.bf16.mxu0 0
    %717 = vmatpush1.bf16.xpose.msra.mxu0 0
    %718 = vmatprep.subr.bf16.mxu0 0
    %719 = vmatpush1.bf16.xpose.msra.mxu0 0
    %720 = vmatprep.subr.bf16.mxu0 0
    %721 = vmatpush1.bf16.xpose.msra.mxu0 0
    %722 = vmatprep.subr.bf16.mxu0 0
    %723 = vmatpush1.bf16.xpose.msra.mxu0 0
    %724 = vmatprep.subr.bf16.mxu0 0
    %725 = vmatpush1.bf16.xpose.msra.mxu0 0
    %726 = vmatprep.subr.bf16.mxu0 0
    %727 = vmatpush1.bf16.xpose.msra.mxu0 0
    %728 = vmatprep.subr.bf16.mxu0 0
    %729 = vmatpush1.bf16.xpose.msra.mxu0 0
    %730 = vmatprep.subr.bf16.mxu0 0
    %731 = vmatpush1.bf16.xpose.msra.mxu0 0
    %732 = vmatprep.subr.bf16.mxu0 0
    %733 = vmatpush1.bf16.xpose.msra.mxu0 0
    %734 = vmatprep.subr.bf16.mxu0 0
    %735 = vmatpush1.bf16.xpose.msra.mxu0 0
    %736 = vmatprep.mubr.bf16.mxu0 0
    %737 = vmatmul.mubr.bf16.gmra.mrb[0].mxu0 %v702
    %v738 = vpop.f32.mrb[0].mxu0
    %v739 = vadd.f32 0.0, %v738
    %v740 = vpop.f32.mrb[0].mxu0
    %v741 = vpop.f32.mrb[0].mxu0
    %v742 = vpop.f32.mrb[0].mxu0
    %743 = vdwg.mxu0
    %v744 = vpack.i.b16 %v556, %v556
    %v745 = vlaneseq
    %v746 = vshrl.u32 %v745, 7
    %v747 = vsub.s32 0, %v746
    %v748 = vrot.slane %v744, %v747
    %750 = vmatprep.subr.bf16.mxu0 0
    %751 = vmatpush1.bf16.xpose.msra.mxu0 %v521
    %752 = vmatprep.subr.bf16.mxu0 0
    %753 = vmatpush1.bf16.xpose.msra.mxu0 0
    %754 = vmatprep.subr.bf16.mxu0 0
    %755 = vmatpush1.bf16.xpose.msra.mxu0 0
    %756 = vmatprep.subr.bf16.mxu0 0
    %757 = vmatpush1.bf16.xpose.msra.mxu0 0
    %758 = vmatprep.subr.bf16.mxu0 0
    %759 = vmatpush1.bf16.xpose.msra.mxu0 0
    %760 = vmatprep.subr.bf16.mxu0 0
    %761 = vmatpush1.bf16.xpose.msra.mxu0 0
    %762 = vmatprep.subr.bf16.mxu0 0
    %763 = vmatpush1.bf16.xpose.msra.mxu0 0
    %764 = vmatprep.subr.bf16.mxu0 0
    %765 = vmatpush1.bf16.xpose.msra.mxu0 0
    %766 = vmatprep.subr.bf16.mxu0 0
    %767 = vmatpush1.bf16.xpose.msra.mxu0 0
    %768 = vmatprep.subr.bf16.mxu0 0
    %769 = vmatpush1.bf16.xpose.msra.mxu0 0
    %770 = vmatprep.subr.bf16.mxu0 0
    %771 = vmatpush1.bf16.xpose.msra.mxu0 0
    %772 = vmatprep.subr.bf16.mxu0 0
    %773 = vmatpush1.bf16.xpose.msra.mxu0 0
    %774 = vmatprep.subr.bf16.mxu0 0
    %775 = vmatpush1.bf16.xpose.msra.mxu0 0
    %776 = vmatprep.subr.bf16.mxu0 0
    %777 = vmatpush1.bf16.xpose.msra.mxu0 0
    %778 = vmatprep.subr.bf16.mxu0 0
    %779 = vmatpush1.bf16.xpose.msra.mxu0 0
    %780 = vmatprep.subr.bf16.mxu0 0
    %781 = vmatpush1.bf16.xpose.msra.mxu0 0
    %782 = vmatprep.mubr.bf16.mxu0 0
    %783 = vmatmul.mubr.bf16.gmra.mrb[0].mxu0 %v748
    %v784 = vpop.f32.mrb[0].mxu0
    %v785 = vadd.f32 0.0, %v784
    %v786 = vpop.f32.mrb[0].mxu0
    %v787 = vpop.f32.mrb[0].mxu0
    %v788 = vpop.f32.mrb[0].mxu0
    %789 = vdwg.mxu0
    %v790 = vpack.i.b16 %v557, %v557
    %v791 = vlaneseq
    %v792 = vshrl.u32 %v791, 7
    %v793 = vsub.s32 0, %v792
    %v794 = vrot.slane %v790, %v793
    %796 = vmatprep.subr.bf16.mxu0 0
    %797 = vmatpush1.bf16.xpose.msra.mxu0 %v522
    %798 = vmatprep.subr.bf16.mxu0 0
    %799 = vmatpush1.bf16.xpose.msra.mxu0 0
    %800 = vmatprep.subr.bf16.mxu0 0
    %801 = vmatpush1.bf16.xpose.msra.mxu0 0
    %802 = vmatprep.subr.bf16.mxu0 0
    %803 = vmatpush1.bf16.xpose.msra.mxu0 0
    %804 = vmatprep.subr.bf16.mxu0 0
    %805 = vmatpush1.bf16.xpose.msra.mxu0 0
    %806 = vmatprep.subr.bf16.mxu0 0
    %807 = vmatpush1.bf16.xpose.msra.mxu0 0
    %808 = vmatprep.subr.bf16.mxu0 0
    %809 = vmatpush1.bf16.xpose.msra.mxu0 0
    %810 = vmatprep.subr.bf16.mxu0 0
    %811 = vmatpush1.bf16.xpose.msra.mxu0 0
    %812 = vmatprep.subr.bf16.mxu0 0
    %813 = vmatpush1.bf16.xpose.msra.mxu0 0
    %814 = vmatprep.subr.bf16.mxu0 0
    %815 = vmatpush1.bf16.xpose.msra.mxu0 0
    %816 = vmatprep.subr.bf16.mxu0 0
    %817 = vmatpush1.bf16.xpose.msra.mxu0 0
    %818 = vmatprep.subr.bf16.mxu0 0
    %819 = vmatpush1.bf16.xpose.msra.mxu0 0
    %820 = vmatprep.subr.bf16.mxu0 0
    %821 = vmatpush1.bf16.xpose.msra.mxu0 0
    %822 = vmatprep.subr.bf16.mxu0 0
    %823 = vmatpush1.bf16.xpose.msra.mxu0 0
    %824 = vmatprep.subr.bf16.mxu0 0
    %825 = vmatpush1.bf16.xpose.msra.mxu0 0
    %826 = vmatprep.subr.bf16.mxu0 0
    %827 = vmatpush1.bf16.xpose.msra.mxu0 0
    %828 = vmatprep.mubr.bf16.mxu0 0
    %829 = vmatmul.mubr.bf16.gmra.mrb[0].mxu0 %v794
    %v830 = vpop.f32.mrb[0].mxu0
    %v831 = vadd.f32 0.0, %v830
    %v832 = vpop.f32.mrb[0].mxu0
    %v833 = vpop.f32.mrb[0].mxu0
    %v834 = vpop.f32.mrb[0].mxu0
    %835 = vdwg.mxu0
    %v836 = vpack.i.b16 %v558, %v558
    %v837 = vlaneseq
    %v838 = vshrl.u32 %v837, 7
    %v839 = vsub.s32 0, %v838
    %v840 = vrot.slane %v836, %v839
    %842 = vmatprep.subr.bf16.mxu0 0
    %843 = vmatpush1.bf16.xpose.msra.mxu0 %v523
    %844 = vmatprep.subr.bf16.mxu0 0
    %845 = vmatpush1.bf16.xpose.msra.mxu0 0
    %846 = vmatprep.subr.bf16.mxu0 0
    %847 = vmatpush1.bf16.xpose.msra.mxu0 0
    %848 = vmatprep.subr.bf16.mxu0 0
    %849 = vmatpush1.bf16.xpose.msra.mxu0 0
    %850 = vmatprep.subr.bf16.mxu0 0
    %851 = vmatpush1.bf16.xpose.msra.mxu0 0
    %852 = vmatprep.subr.bf16.mxu0 0
    %853 = vmatpush1.bf16.xpose.msra.mxu0 0
    %854 = vmatprep.subr.bf16.mxu0 0
    %855 = vmatpush1.bf16.xpose.msra.mxu0 0
    %856 = vmatprep.subr.bf16.mxu0 0
    %857 = vmatpush1.bf16.xpose.msra.mxu0 0
    %858 = vmatprep.subr.bf16.mxu0 0
    %859 = vmatpush1.bf16.xpose.msra.mxu0 0
    %860 = vmatprep.subr.bf16.mxu0 0
    %861 = vmatpush1.bf16.xpose.msra.mxu0 0
    %862 = vmatprep.subr.bf16.mxu0 0
    %863 = vmatpush1.bf16.xpose.msra.mxu0 0
    %864 = vmatprep.subr.bf16.mxu0 0
    %865 = vmatpush1.bf16.xpose.msra.mxu0 0
    %866 = vmatprep.subr.bf16.mxu0 0
    %867 = vmatpush1.bf16.xpose.msra.mxu0 0
    %868 = vmatprep.subr.bf16.mxu0 0
    %869 = vmatpush1.bf16.xpose.msra.mxu0 0
    %870 = vmatprep.subr.bf16.mxu0 0
    %871 = vmatpush1.bf16.xpose.msra.mxu0 0
    %872 = vmatprep.subr.bf16.mxu0 0
    %873 = vmatpush1.bf16.xpose.msra.mxu0 0
    %874 = vmatprep.mubr.bf16.mxu0 0
    %875 = vmatmul.mubr.bf16.gmra.mrb[0].mxu0 %v840
    %v876 = vpop.f32.mrb[0].mxu0
    %v877 = vadd.f32 0.0, %v876
    %v878 = vpop.f32.mrb[0].mxu0
    %v879 = vpop.f32.mrb[0].mxu0
    %v880 = vpop.f32.mrb[0].mxu0
    %881 = vdwg.mxu0
    %v882 = vpack.i.b16 %v559, %v559
    %v883 = vlaneseq
    %v884 = vshrl.u32 %v883, 7
    %v885 = vsub.s32 0, %v884
    %v886 = vrot.slane %v882, %v885
    %888 = vmatprep.subr.bf16.mxu0 0
    %889 = vmatpush1.bf16.xpose.msra.mxu0 %v524
    %890 = vmatprep.subr.bf16.mxu0 0
    %891 = vmatpush1.bf16.xpose.msra.mxu0 0
    %892 = vmatprep.subr.bf16.mxu0 0
    %893 = vmatpush1.bf16.xpose.msra.mxu0 0
    %894 = vmatprep.subr.bf16.mxu0 0
    %895 = vmatpush1.bf16.xpose.msra.mxu0 0
    %896 = vmatprep.subr.bf16.mxu0 0
    %897 = vmatpush1.bf16.xpose.msra.mxu0 0
    %898 = vmatprep.subr.bf16.mxu0 0
    %899 = vmatpush1.bf16.xpose.msra.mxu0 0
    %900 = vmatprep.subr.bf16.mxu0 0
    %901 = vmatpush1.bf16.xpose.msra.mxu0 0
    %902 = vmatprep.subr.bf16.mxu0 0
    %903 = vmatpush1.bf16.xpose.msra.mxu0 0
    %904 = vmatprep.subr.bf16.mxu0 0
    %905 = vmatpush1.bf16.xpose.msra.mxu0 0
    %906 = vmatprep.subr.bf16.mxu0 0
    %907 = vmatpush1.bf16.xpose.msra.mxu0 0
    %908 = vmatprep.subr.bf16.mxu0 0
    %909 = vmatpush1.bf16.xpose.msra.mxu0 0
    %910 = vmatprep.subr.bf16.mxu0 0
    %911 = vmatpush1.bf16.xpose.msra.mxu0 0
    %912 = vmatprep.subr.bf16.mxu0 0
    %913 = vmatpush1.bf16.xpose.msra.mxu0 0
    %914 = vmatprep.subr.bf16.mxu0 0
    %915 = vmatpush1.bf16.xpose.msra.mxu0 0
    %916 = vmatprep.subr.bf16.mxu0 0
    %917 = vmatpush1.bf16.xpose.msra.mxu0 0
    %918 = vmatprep.subr.bf16.mxu0 0
    %919 = vmatpush1.bf16.xpose.msra.mxu0 0
    %920 = vmatprep.mubr.bf16.mxu0 0
    %921 = vmatmul.mubr.bf16.gmra.mrb[0].mxu0 %v886
    %v922 = vpop.f32.mrb[0].mxu0
    %v923 = vadd.f32 0.0, %v922
    %v924 = vpop.f32.mrb[0].mxu0
    %v925 = vpop.f32.mrb[0].mxu0
    %v926 = vpop.f32.mrb[0].mxu0
    %927 = vdwg.mxu0
    %v928 = vld [vmem:[%s2] sm:$0xff]
    %vm929 = vcmp.gt.f32.partialorder %v928, 0.5
    %v938 = vrot.slane %v647, 7
    %vm939 = vcmask 1041409
    %v940 = vsel %vm939, %v938, %v601
    %v941 = vrot.slane %v693, 6
    %vm942 = vcmask 1042434
    %v943 = vsel %vm942, %v941, %v940
    %v944 = vrot.slane %v739, 5
    %vm945 = vcmask 1043459
    %v946 = vsel %vm945, %v944, %v943
    %v947 = vrot.slane %v785, 4
    %vm948 = vcmask 1044484
    %v949 = vsel %vm948, %v947, %v946
    %v950 = vrot.slane %v831, 3
    %vm951 = vcmask 1045509
    %v952 = vsel %vm951, %v950, %v949
    %v953 = vrot.slane %v877, 2
    %vm954 = vcmask 1046534
    %v955 = vsel %vm954, %v953, %v952
    %v956 = vrot.slane %v923, 1
    %vm957 = vcmask 1047559
    %v958 = vsel %vm957, %v956, %v955
    %v960 = vsel %vm929, %v958, -1e+09
    %v961 = vld [vmem:[#allocation3] sm:$0xff]
    %vm962 = vcmask 64512
    %v963 = vsel %vm962, %v960, -inf
    %964 = vmax.xlane.f32.xlu0 %v963
    %v965 = vpop.xlane.xlu0 %964
    %v966 = vmax.f32 %v961, %v965
    %v967 = vsub.f32 %v961, %v966
    %v968 = vmul.f32 %v967, 1.442695
    %v969 = vpow.pop %v968
    %971 = vset.pattern.permute.xlu0 0
    %972 = vperm.xlu0 %971, %v966
    %v973 = vpop.permute.xlu0 %972
    %v975 = vsub.f32 %v960, %v973
    %v976 = vmul.f32 %v975, 1.442695
    %v977 = vpow.pop %v976
    %v978 = vld [vmem:[#allocation4] sm:$0xff]
    %v979 = vmul.f32 %v969, %v978
    %v980 = vsel %vm962, %v977, 0.0
    %981 = vadd.xlane.f32.xlu0 %v980
    %v982 = vpop.xlane.xlu0 %981
    %v983 = vadd.f32 %v979, %v982
    %vm984 = vcmask 7168
    %985 = vst.msk [vmem:[#allocation4] sm:$0xff] %vm984, %v983
    %v986 = vpack.c.bf16 %v977, %v977
    %v989 = vunpack.c.l.s4 1966171168
    %v990 = vunpack.c.0.s8 %v989
    %v991 = vlaneseq
    %v992 = vshrl.u32 %v991, 7
    %v993 = vsub.s32 %v990, %v992
    %v994 = vrot.slane %v986, %v993
    %v995 = vcombine.high %v994, %v994
    %v997 = vunpack.c.l.s4 1966171168
    %v998 = vunpack.c.0.s8 %v997
    %v999 = vlaneseq
    %v1000 = vshrl.u32 %v999, 7
    %v1001 = vsub.s32 %v998, %v1000
    %v1002 = vrot.slane %v994, %v1001
    %v1004 = vunpack.c.l.s4 1966171168
    %v1005 = vunpack.c.0.s8 %v1004
    %v1006 = vlaneseq
    %v1007 = vshrl.u32 %v1006, 7
    %v1008 = vsub.s32 %v1005, %v1007
    %v1009 = vrot.slane %v995, %v1008
    %v1010 = vcombine.high %v1002, %v1002
    %v1011 = vcombine.high %v1009, %v1009
    %v1012 = vunpack.i.l.s16 %v1002
    %v1013 = vunpack.i.h.s16 %v1002
    %v1014 = vunpack.i.l.s16 %v1009
    %v1015 = vunpack.i.h.s16 %v1009
    %v1016 = vunpack.i.l.s16 %v1010
    %v1017 = vunpack.i.h.s16 %v1010
    %v1018 = vunpack.i.l.s16 %v1011
    %v1019 = vunpack.i.h.s16 %v1011
    %v1020 = vpack.i.b16 %v1012, %v1012
    %v1021 = vlaneseq
    %v1022 = vshrl.u32 %v1021, 7
    %v1023 = vsub.s32 0, %v1022
    %v1024 = vrot.slane %v1020, %v1023
    %v1026 = vsel %vm962, %v1024, 0
    %vm1028 = vcmask 1043456
    %v1030 = vsel %vm1028, %v517, 0
    %1032 = vmatprep.subr.bf16.mxu0 0
    %1033 = vmatpush1.bf16.msra.mxu0 %v1030
    %1034 = vmatprep.subr.bf16.mxu0 0
    %1035 = vmatpush1.bf16.msra.mxu0 0
    %1036 = vmatprep.subr.bf16.mxu0 0
    %1037 = vmatpush1.bf16.msra.mxu0 0
    %1038 = vmatprep.subr.bf16.mxu0 0
    %1039 = vmatpush1.bf16.msra.mxu0 0
    %1040 = vmatprep.subr.bf16.mxu0 0
    %1041 = vmatpush1.bf16.msra.mxu0 0
    %1042 = vmatprep.subr.bf16.mxu0 0
    %1043 = vmatpush1.bf16.msra.mxu0 0
    %1044 = vmatprep.subr.bf16.mxu0 0
    %1045 = vmatpush1.bf16.msra.mxu0 0
    %1046 = vmatprep.subr.bf16.mxu0 0
    %1047 = vmatpush1.bf16.msra.mxu0 0
    %1048 = vmatprep.subr.bf16.mxu0 0
    %1049 = vmatpush1.bf16.msra.mxu0 0
    %1050 = vmatprep.subr.bf16.mxu0 0
    %1051 = vmatpush1.bf16.msra.mxu0 0
    %1052 = vmatprep.subr.bf16.mxu0 0
    %1053 = vmatpush1.bf16.msra.mxu0 0
    %1054 = vmatprep.subr.bf16.mxu0 0
    %1055 = vmatpush1.bf16.msra.mxu0 0
    %1056 = vmatprep.subr.bf16.mxu0 0
    %1057 = vmatpush1.bf16.msra.mxu0 0
    %1058 = vmatprep.subr.bf16.mxu0 0
    %1059 = vmatpush1.bf16.msra.mxu0 0
    %1060 = vmatprep.subr.bf16.mxu0 0
    %1061 = vmatpush1.bf16.msra.mxu0 0
    %1062 = vmatprep.subr.bf16.mxu0 0
    %1063 = vmatpush1.bf16.msra.mxu0 0
    %1064 = vmatprep.mubr.bf16.mxu0 0
    %1065 = vmatmul.mubr.bf16.gmra.mrb[0].mxu0 %v1026
    %v1066 = vpop.f32.mrb[0].mxu0
    %v1067 = vadd.f32 0.0, %v1066
    %v1068 = vpop.f32.mrb[0].mxu0
    %v1069 = vpop.f32.mrb[0].mxu0
    %v1070 = vpop.f32.mrb[0].mxu0
    %1071 = vdwg.mxu0
    %v1072 = vpack.i.b16 %v1013, %v1013
    %v1073 = vlaneseq
    %v1074 = vshrl.u32 %v1073, 7
    %v1075 = vsub.s32 0, %v1074
    %v1076 = vrot.slane %v1072, %v1075
    %v1078 = vsel %vm962, %v1076, 0
    %v1081 = vsel %vm1028, %v518, 0
    %1083 = vmatprep.subr.bf16.mxu0 0
    %1084 = vmatpush1.bf16.msra.mxu0 %v1081
    %1085 = vmatprep.subr.bf16.mxu0 0
    %1086 = vmatpush1.bf16.msra.mxu0 0
    %1087 = vmatprep.subr.bf16.mxu0 0
    %1088 = vmatpush1.bf16.msra.mxu0 0
    %1089 = vmatprep.subr.bf16.mxu0 0
    %1090 = vmatpush1.bf16.msra.mxu0 0
    %1091 = vmatprep.subr.bf16.mxu0 0
    %1092 = vmatpush1.bf16.msra.mxu0 0
    %1093 = vmatprep.subr.bf16.mxu0 0
    %1094 = vmatpush1.bf16.msra.mxu0 0
    %1095 = vmatprep.subr.bf16.mxu0 0
    %1096 = vmatpush1.bf16.msra.mxu0 0
    %1097 = vmatprep.subr.bf16.mxu0 0
    %1098 = vmatpush1.bf16.msra.mxu0 0
    %1099 = vmatprep.subr.bf16.mxu0 0
    %1100 = vmatpush1.bf16.msra.mxu0 0
    %1101 = vmatprep.subr.bf16.mxu0 0
    %1102 = vmatpush1.bf16.msra.mxu0 0
    %1103 = vmatprep.subr.bf16.mxu0 0
    %1104 = vmatpush1.bf16.msra.mxu0 0
    %1105 = vmatprep.subr.bf16.mxu0 0
    %1106 = vmatpush1.bf16.msra.mxu0 0
    %1107 = vmatprep.subr.bf16.mxu0 0
    %1108 = vmatpush1.bf16.msra.mxu0 0
    %1109 = vmatprep.subr.bf16.mxu0 0
    %1110 = vmatpush1.bf16.msra.mxu0 0
    %1111 = vmatprep.subr.bf16.mxu0 0
    %1112 = vmatpush1.bf16.msra.mxu0 0
    %1113 = vmatprep.subr.bf16.mxu0 0
    %1114 = vmatpush1.bf16.msra.mxu0 0
    %1115 = vmatprep.mubr.bf16.mxu0 0
    %1116 = vmatmul.mubr.bf16.gmra.mrb[0].mxu0 %v1078
    %v1117 = vpop.f32.mrb[0].mxu0
    %v1118 = vadd.f32 0.0, %v1117
    %v1119 = vpop.f32.mrb[0].mxu0
    %v1120 = vpop.f32.mrb[0].mxu0
    %v1121 = vpop.f32.mrb[0].mxu0
    %1122 = vdwg.mxu0
    %v1123 = vpack.i.b16 %v1014, %v1014
    %v1124 = vlaneseq
    %v1125 = vshrl.u32 %v1124, 7
    %v1126 = vsub.s32 0, %v1125
    %v1127 = vrot.slane %v1123, %v1126
    %v1129 = vsel %vm962, %v1127, 0
    %v1132 = vsel %vm1028, %v519, 0
    %1134 = vmatprep.subr.bf16.mxu0 0
    %1135 = vmatpush1.bf16.msra.mxu0 %v1132
    %1136 = vmatprep.subr.bf16.mxu0 0
    %1137 = vmatpush1.bf16.msra.mxu0 0
    %1138 = vmatprep.subr.bf16.mxu0 0
    %1139 = vmatpush1.bf16.msra.mxu0 0
    %1140 = vmatprep.subr.bf16.mxu0 0
    %1141 = vmatpush1.bf16.msra.mxu0 0
    %1142 = vmatprep.subr.bf16.mxu0 0
    %1143 = vmatpush1.bf16.msra.mxu0 0
    %1144 = vmatprep.subr.bf16.mxu0 0
    %1145 = vmatpush1.bf16.msra.mxu0 0
    %1146 = vmatprep.subr.bf16.mxu0 0
    %1147 = vmatpush1.bf16.msra.mxu0 0
    %1148 = vmatprep.subr.bf16.mxu0 0
    %1149 = vmatpush1.bf16.msra.mxu0 0
    %1150 = vmatprep.subr.bf16.mxu0 0
    %1151 = vmatpush1.bf16.msra.mxu0 0
    %1152 = vmatprep.subr.bf16.mxu0 0
    %1153 = vmatpush1.bf16.msra.mxu0 0
    %1154 = vmatprep.subr.bf16.mxu0 0
    %1155 = vmatpush1.bf16.msra.mxu0 0
    %1156 = vmatprep.subr.bf16.mxu0 0
    %1157 = vmatpush1.bf16.msra.mxu0 0
    %1158 = vmatprep.subr.bf16.mxu0 0
    %1159 = vmatpush1.bf16.msra.mxu0 0
    %1160 = vmatprep.subr.bf16.mxu0 0
    %1161 = vmatpush1.bf16.msra.mxu0 0
    %1162 = vmatprep.subr.bf16.mxu0 0
    %1163 = vmatpush1.bf16.msra.mxu0 0
    %1164 = vmatprep.subr.bf16.mxu0 0
    %1165 = vmatpush1.bf16.msra.mxu0 0
    %1166 = vmatprep.mubr.bf16.mxu0 0
    %1167 = vmatmul.mubr.bf16.gmra.mrb[0].mxu0 %v1129
    %v1168 = vpop.f32.mrb[0].mxu0
    %v1169 = vadd.f32 0.0, %v1168
    %v1170 = vpop.f32.mrb[0].mxu0
    %v1171 = vpop.f32.mrb[0].mxu0
    %v1172 = vpop.f32.mrb[0].mxu0
    %1173 = vdwg.mxu0
    %v1174 = vpack.i.b16 %v1015, %v1015
    %v1175 = vlaneseq
    %v1176 = vshrl.u32 %v1175, 7
    %v1177 = vsub.s32 0, %v1176
    %v1178 = vrot.slane %v1174, %v1177
    %v1180 = vsel %vm962, %v1178, 0
    %v1183 = vsel %vm1028, %v520, 0
    %1185 = vmatprep.subr.bf16.mxu0 0
    %1186 = vmatpush1.bf16.msra.mxu0 %v1183
    %1187 = vmatprep.subr.bf16.mxu0 0
    %1188 = vmatpush1.bf16.msra.mxu0 0
    %1189 = vmatprep.subr.bf16.mxu0 0
    %1190 = vmatpush1.bf16.msra.mxu0 0
    %1191 = vmatprep.subr.bf16.mxu0 0
    %1192 = vmatpush1.bf16.msra.mxu0 0
    %1193 = vmatprep.subr.bf16.mxu0 0
    %1194 = vmatpush1.bf16.msra.mxu0 0
    %1195 = vmatprep.subr.bf16.mxu0 0
    %1196 = vmatpush1.bf16.msra.mxu0 0
    %1197 = vmatprep.subr.bf16.mxu0 0
    %1198 = vmatpush1.bf16.msra.mxu0 0
    %1199 = vmatprep.subr.bf16.mxu0 0
    %1200 = vmatpush1.bf16.msra.mxu0 0
    %1201 = vmatprep.subr.bf16.mxu0 0
    %1202 = vmatpush1.bf16.msra.mxu0 0
    %1203 = vmatprep.subr.bf16.mxu0 0
    %1204 = vmatpush1.bf16.msra.mxu0 0
    %1205 = vmatprep.subr.bf16.mxu0 0
    %1206 = vmatpush1.bf16.msra.mxu0 0
    %1207 = vmatprep.subr.bf16.mxu0 0
    %1208 = vmatpush1.bf16.msra.mxu0 0
    %1209 = vmatprep.subr.bf16.mxu0 0
    %1210 = vmatpush1.bf16.msra.mxu0 0
    %1211 = vmatprep.subr.bf16.mxu0 0
    %1212 = vmatpush1.bf16.msra.mxu0 0
    %1213 = vmatprep.subr.bf16.mxu0 0
    %1214 = vmatpush1.bf16.msra.mxu0 0
    %1215 = vmatprep.subr.bf16.mxu0 0
    %1216 = vmatpush1.bf16.msra.mxu0 0
    %1217 = vmatprep.mubr.bf16.mxu0 0
    %1218 = vmatmul.mubr.bf16.gmra.mrb[0].mxu0 %v1180
    %v1219 = vpop.f32.mrb[0].mxu0
    %v1220 = vadd.f32 0.0, %v1219
    %v1221 = vpop.f32.mrb[0].mxu0
    %v1222 = vpop.f32.mrb[0].mxu0
    %v1223 = vpop.f32.mrb[0].mxu0
    %1224 = vdwg.mxu0
    %v1225 = vpack.i.b16 %v1016, %v1016
    %v1226 = vlaneseq
    %v1227 = vshrl.u32 %v1226, 7
    %v1228 = vsub.s32 0, %v1227
    %v1229 = vrot.slane %v1225, %v1228
    %v1231 = vsel %vm962, %v1229, 0
    %v1234 = vsel %vm1028, %v521, 0
    %1236 = vmatprep.subr.bf16.mxu0 0
    %1237 = vmatpush1.bf16.msra.mxu0 %v1234
    %1238 = vmatprep.subr.bf16.mxu0 0
    %1239 = vmatpush1.bf16.msra.mxu0 0
    %1240 = vmatprep.subr.bf16.mxu0 0
    %1241 = vmatpush1.bf16.msra.mxu0 0
    %1242 = vmatprep.subr.bf16.mxu0 0
    %1243 = vmatpush1.bf16.msra.mxu0 0
    %1244 = vmatprep.subr.bf16.mxu0 0
    %1245 = vmatpush1.bf16.msra.mxu0 0
    %1246 = vmatprep.subr.bf16.mxu0 0
    %1247 = vmatpush1.bf16.msra.mxu0 0
    %1248 = vmatprep.subr.bf16.mxu0 0
    %1249 = vmatpush1.bf16.msra.mxu0 0
    %1250 = vmatprep.subr.bf16.mxu0 0
    %1251 = vmatpush1.bf16.msra.mxu0 0
    %1252 = vmatprep.subr.bf16.mxu0 0
    %1253 = vmatpush1.bf16.msra.mxu0 0
    %1254 = vmatprep.subr.bf16.mxu0 0
    %1255 = vmatpush1.bf16.msra.mxu0 0
    %1256 = vmatprep.subr.bf16.mxu0 0
    %1257 = vmatpush1.bf16.msra.mxu0 0
    %1258 = vmatprep.subr.bf16.mxu0 0
    %1259 = vmatpush1.bf16.msra.mxu0 0
    %1260 = vmatprep.subr.bf16.mxu0 0
    %1261 = vmatpush1.bf16.msra.mxu0 0
    %1262 = vmatprep.subr.bf16.mxu0 0
    %1263 = vmatpush1.bf16.msra.mxu0 0
    %1264 = vmatprep.subr.bf16.mxu0 0
    %1265 = vmatpush1.bf16.msra.mxu0 0
    %1266 = vmatprep.subr.bf16.mxu0 0
    %1267 = vmatpush1.bf16.msra.mxu0 0
    %1268 = vmatprep.mubr.bf16.mxu0 0
    %1269 = vmatmul.mubr.bf16.gmra.mrb[0].mxu0 %v1231
    %v1270 = vpop.f32.mrb[0].mxu0
    %v1271 = vadd.f32 0.0, %v1270
    %v1272 = vpop.f32.mrb[0].mxu0
    %v1273 = vpop.f32.mrb[0].mxu0
    %v1274 = vpop.f32.mrb[0].mxu0
    %1275 = vdwg.mxu0
    %v1276 = vpack.i.b16 %v1017, %v1017
    %v1277 = vlaneseq
    %v1278 = vshrl.u32 %v1277, 7
    %v1279 = vsub.s32 0, %v1278
    %v1280 = vrot.slane %v1276, %v1279
    %v1282 = vsel %vm962, %v1280, 0
    %v1285 = vsel %vm1028, %v522, 0
    %1287 = vmatprep.subr.bf16.mxu0 0
    %1288 = vmatpush1.bf16.msra.mxu0 %v1285
    %1289 = vmatprep.subr.bf16.mxu0 0
    %1290 = vmatpush1.bf16.msra.mxu0 0
    %1291 = vmatprep.subr.bf16.mxu0 0
    %1292 = vmatpush1.bf16.msra.mxu0 0
    %1293 = vmatprep.subr.bf16.mxu0 0
    %1294 = vmatpush1.bf16.msra.mxu0 0
    %1295 = vmatprep.subr.bf16.mxu0 0
    %1296 = vmatpush1.bf16.msra.mxu0 0
    %1297 = vmatprep.subr.bf16.mxu0 0
    %1298 = vmatpush1.bf16.msra.mxu0 0
    %1299 = vmatprep.subr.bf16.mxu0 0
    %1300 = vmatpush1.bf16.msra.mxu0 0
    %1301 = vmatprep.subr.bf16.mxu0 0
    %1302 = vmatpush1.bf16.msra.mxu0 0
    %1303 = vmatprep.subr.bf16.mxu0 0
    %1304 = vmatpush1.bf16.msra.mxu0 0
    %1305 = vmatprep.subr.bf16.mxu0 0
    %1306 = vmatpush1.bf16.msra.mxu0 0
    %1307 = vmatprep.subr.bf16.mxu0 0
    %1308 = vmatpush1.bf16.msra.mxu0 0
    %1309 = vmatprep.subr.bf16.mxu0 0
    %1310 = vmatpush1.bf16.msra.mxu0 0
    %1311 = vmatprep.subr.bf16.mxu0 0
    %1312 = vmatpush1.bf16.msra.mxu0 0
    %1313 = vmatprep.subr.bf16.mxu0 0
    %1314 = vmatpush1.bf16.msra.mxu0 0
    %1315 = vmatprep.subr.bf16.mxu0 0
    %1316 = vmatpush1.bf16.msra.mxu0 0
    %1317 = vmatprep.subr.bf16.mxu0 0
    %1318 = vmatpush1.bf16.msra.mxu0 0
    %1319 = vmatprep.mubr.bf16.mxu0 0
    %1320 = vmatmul.mubr.bf16.gmra.mrb[0].mxu0 %v1282
    %v1321 = vpop.f32.mrb[0].mxu0
    %v1322 = vadd.f32 0.0, %v1321
    %v1323 = vpop.f32.mrb[0].mxu0
    %v1324 = vpop.f32.mrb[0].mxu0
    %v1325 = vpop.f32.mrb[0].mxu0
    %1326 = vdwg.mxu0
    %v1327 = vpack.i.b16 %v1018, %v1018
    %v1328 = vlaneseq
    %v1329 = vshrl.u32 %v1328, 7
    %v1330 = vsub.s32 0, %v1329
    %v1331 = vrot.slane %v1327, %v1330
    %v1333 = vsel %vm962, %v1331, 0
    %v1336 = vsel %vm1028, %v523, 0
    %1338 = vmatprep.subr.bf16.mxu0 0
    %1339 = vmatpush1.bf16.msra.mxu0 %v1336
    %1340 = vmatprep.subr.bf16.mxu0 0
    %1341 = vmatpush1.bf16.msra.mxu0 0
    %1342 = vmatprep.subr.bf16.mxu0 0
    %1343 = vmatpush1.bf16.msra.mxu0 0
    %1344 = vmatprep.subr.bf16.mxu0 0
    %1345 = vmatpush1.bf16.msra.mxu0 0
    %1346 = vmatprep.subr.bf16.mxu0 0
    %1347 = vmatpush1.bf16.msra.mxu0 0
    %1348 = vmatprep.subr.bf16.mxu0 0
    %1349 = vmatpush1.bf16.msra.mxu0 0
    %1350 = vmatprep.subr.bf16.mxu0 0
    %1351 = vmatpush1.bf16.msra.mxu0 0
    %1352 = vmatprep.subr.bf16.mxu0 0
    %1353 = vmatpush1.bf16.msra.mxu0 0
    %1354 = vmatprep.subr.bf16.mxu0 0
    %1355 = vmatpush1.bf16.msra.mxu0 0
    %1356 = vmatprep.subr.bf16.mxu0 0
    %1357 = vmatpush1.bf16.msra.mxu0 0
    %1358 = vmatprep.subr.bf16.mxu0 0
    %1359 = vmatpush1.bf16.msra.mxu0 0
    %1360 = vmatprep.subr.bf16.mxu0 0
    %1361 = vmatpush1.bf16.msra.mxu0 0
    %1362 = vmatprep.subr.bf16.mxu0 0
    %1363 = vmatpush1.bf16.msra.mxu0 0
    %1364 = vmatprep.subr.bf16.mxu0 0
    %1365 = vmatpush1.bf16.msra.mxu0 0
    %1366 = vmatprep.subr.bf16.mxu0 0
    %1367 = vmatpush1.bf16.msra.mxu0 0
    %1368 = vmatprep.subr.bf16.mxu0 0
    %1369 = vmatpush1.bf16.msra.mxu0 0
    %1370 = vmatprep.mubr.bf16.mxu0 0
    %1371 = vmatmul.mubr.bf16.gmra.mrb[0].mxu0 %v1333
    %v1372 = vpop.f32.mrb[0].mxu0
    %v1373 = vadd.f32 0.0, %v1372
    %v1374 = vpop.f32.mrb[0].mxu0
    %v1375 = vpop.f32.mrb[0].mxu0
    %v1376 = vpop.f32.mrb[0].mxu0
    %1377 = vdwg.mxu0
    %v1378 = vpack.i.b16 %v1019, %v1019
    %v1379 = vlaneseq
    %v1380 = vshrl.u32 %v1379, 7
    %v1381 = vsub.s32 0, %v1380
    %v1382 = vrot.slane %v1378, %v1381
    %v1384 = vsel %vm962, %v1382, 0
    %v1387 = vsel %vm1028, %v524, 0
    %1389 = vmatprep.subr.bf16.mxu0 0
    %1390 = vmatpush1.bf16.msra.mxu0 %v1387
    %1391 = vmatprep.subr.bf16.mxu0 0
    %1392 = vmatpush1.bf16.msra.mxu0 0
    %1393 = vmatprep.subr.bf16.mxu0 0
    %1394 = vmatpush1.bf16.msra.mxu0 0
    %1395 = vmatprep.subr.bf16.mxu0 0
    %1396 = vmatpush1.bf16.msra.mxu0 0
    %1397 = vmatprep.subr.bf16.mxu0 0
    %1398 = vmatpush1.bf16.msra.mxu0 0
    %1399 = vmatprep.subr.bf16.mxu0 0
    %1400 = vmatpush1.bf16.msra.mxu0 0
    %1401 = vmatprep.subr.bf16.mxu0 0
    %1402 = vmatpush1.bf16.msra.mxu0 0
    %1403 = vmatprep.subr.bf16.mxu0 0
    %1404 = vmatpush1.bf16.msra.mxu0 0
    %1405 = vmatprep.subr.bf16.mxu0 0
    %1406 = vmatpush1.bf16.msra.mxu0 0
    %1407 = vmatprep.subr.bf16.mxu0 0
    %1408 = vmatpush1.bf16.msra.mxu0 0
    %1409 = vmatprep.subr.bf16.mxu0 0
    %1410 = vmatpush1.bf16.msra.mxu0 0
    %1411 = vmatprep.subr.bf16.mxu0 0
    %1412 = vmatpush1.bf16.msra.mxu0 0
    %1413 = vmatprep.subr.bf16.mxu0 0
    %1414 = vmatpush1.bf16.msra.mxu0 0
    %1415 = vmatprep.subr.bf16.mxu0 0
    %1416 = vmatpush1.bf16.msra.mxu0 0
    %1417 = vmatprep.subr.bf16.mxu0 0
    %1418 = vmatpush1.bf16.msra.mxu0 0
    %1419 = vmatprep.subr.bf16.mxu0 0
    %1420 = vmatpush1.bf16.msra.mxu0 0
    %1421 = vmatprep.mubr.bf16.mxu0 0
    %1422 = vmatmul.mubr.bf16.gmra.mrb[0].mxu0 %v1384
    %v1423 = vpop.f32.mrb[0].mxu0
    %v1424 = vadd.f32 0.0, %v1423
    %v1425 = vpop.f32.mrb[0].mxu0
    %v1426 = vpop.f32.mrb[0].mxu0
    %v1427 = vpop.f32.mrb[0].mxu0
    %1428 = vdwg.mxu0
    %v1429 = vld [vmem:[#allocation5] sm:$0xff]
    %1431 = vset.pattern.permute.xlu0 0
    %1432 = vperm.xlu0 %1431, %v969
    %v1433 = vpop.permute.xlu0 %1432
    %v1435 = vmul.f32 %v1433, %v1429
    %v1444 = vrot.slane %v1118, 7
    %v1445 = vsel %vm939, %v1444, %v1067
    %v1446 = vrot.slane %v1169, 6
    %v1447 = vsel %vm942, %v1446, %v1445
    %v1448 = vrot.slane %v1220, 5
    %v1449 = vsel %vm945, %v1448, %v1447
    %v1450 = vrot.slane %v1271, 4
    %v1451 = vsel %vm948, %v1450, %v1449
    %v1452 = vrot.slane %v1322, 3
    %v1453 = vsel %vm951, %v1452, %v1451
    %v1454 = vrot.slane %v1373, 2
    %v1455 = vsel %vm954, %v1454, %v1453
    %v1456 = vrot.slane %v1424, 1
    %v1457 = vsel %vm957, %v1456, %v1455
    %v1459 = vadd.f32 %v1435, %v1457
    %1460 = vst [vmem:[#allocation5] sm:$0xff] %v1459
    %1461 = vst.msk [vmem:[#allocation3] sm:$0xff] %vm984, %v966
    // Predicated region
    $region98: #{reasoning_reward_forward.1} parent=1 // pred_check
      %p1462 = pneg %p109
    $region99: #{reasoning_reward_forward.1} parent=1 // pred_check_branch
      %1464 = sbr.rel (%p1462) target = $region101
    $region100: #{reasoning_reward_forward.1} parent=1 // pred_region
      %v1465 = vld [vmem:[#allocation4] sm:$0xff]
      %v1466 = vrcp.pop %v1465
      %v1467 = vld [vmem:[#allocation5] sm:$0xff]
      %1469 = vset.pattern.permute.xlu0 0
      %1470 = vperm.xlu0 %1469, %v1466
      %v1471 = vpop.permute.xlu0 %1470
      %v1473 = vmul.f32 %v1467, %v1471
      %v1474 = vpack.c.bf16 %v1473, %v1473
      %v1475 = vld [vmem:[%s8] sm:$0xf]
      %v1476 = vld [vmem:[%s8 + $0x4] sm:$0xf]
      %v1477 = vld [vmem:[%s8 + $0x8] sm:$0xf]
      %v1478 = vld [vmem:[%s8 + $0xc] sm:$0xf]
      %v1479 = vld [vmem:[%s8 + $0x10] sm:$0xf]
      %v1480 = vld [vmem:[%s8 + $0x14] sm:$0xf]
      %v1481 = vld [vmem:[%s8 + $0x18] sm:$0xf]
      %v1482 = vld [vmem:[%s8 + $0x1c] sm:$0xf]
      %v1483 = vld [vmem:[%s8 + $0x20] sm:$0xf]
      %v1484 = vld [vmem:[%s8 + $0x24] sm:$0xf]
      %v1485 = vld [vmem:[%s8 + $0x28] sm:$0xf]
      %v1486 = vld [vmem:[%s8 + $0x2c] sm:$0xf]
      %v1487 = vld [vmem:[%s8 + $0x30] sm:$0xf]
      %v1488 = vld [vmem:[%s8 + $0x34] sm:$0xf]
      %v1489 = vld [vmem:[%s8 + $0x38] sm:$0xf]
      %v1490 = vld [vmem:[%s8 + $0x3c] sm:$0xf]
      %v1491 = vld [vmem:[%s9] sm:$0x1]
      %v1493 = vlaneseq
      %v1494 = vshrl.u32 %v1493, 7
      %v1495 = vsub.s32 0, %v1494
      %v1496 = vrot.slane %v1491, %v1495
      %v1514 = vunpack.c.l.b16 %v1475
      %v1515 = vunpack.c.l.b16 %v1476
      %v1516 = vunpack.c.l.b16 %v1477
      %v1517 = vunpack.c.l.b16 %v1478
      %v1518 = vunpack.c.l.b16 %v1479
      %v1519 = vunpack.c.l.b16 %v1480
      %v1520 = vunpack.c.l.b16 %v1481
      %v1521 = vunpack.c.l.b16 %v1482
      %v1522 = vunpack.c.l.b16 %v1483
      %v1523 = vunpack.c.l.b16 %v1484
      %v1524 = vunpack.c.l.b16 %v1485
      %v1525 = vunpack.c.l.b16 %v1486
      %v1526 = vunpack.c.l.b16 %v1487
      %v1527 = vunpack.c.l.b16 %v1488
      %v1528 = vunpack.c.l.b16 %v1489
      %v1529 = vunpack.c.l.b16 %v1490
      %v1530 = vpack.c.b16 %v1515, %v1514
      %v1531 = vpack.c.b16 %v1517, %v1516
      %v1532 = vpack.c.b16 %v1519, %v1518
      %v1533 = vpack.c.b16 %v1521, %v1520
      %v1534 = vpack.c.b16 %v1523, %v1522
      %v1535 = vpack.c.b16 %v1525, %v1524
      %v1536 = vpack.c.b16 %v1527, %v1526
      %v1537 = vpack.c.b16 %v1529, %v1528
      %1546 = vmatprep.subr.bf16.mxu0 0
      %1547 = vmatpush1.bf16.msra.mxu0 %v1530
      %1548 = vmatprep.subr.bf16.mxu0 0
      %1549 = vmatpush1.bf16.msra.mxu0 %v1531
      %1550 = vmatprep.subr.bf16.mxu0 0
      %1551 = vmatpush1.bf16.msra.mxu0 %v1532
      %1552 = vmatprep.subr.bf16.mxu0 0
      %1553 = vmatpush1.bf16.msra.mxu0 %v1533
      %1554 = vmatprep.subr.bf16.mxu0 0
      %1555 = vmatpush1.bf16.msra.mxu0 %v1534
      %1556 = vmatprep.subr.bf16.mxu0 0
      %1557 = vmatpush1.bf16.msra.mxu0 %v1535
      %1558 = vmatprep.subr.bf16.mxu0 0
      %1559 = vmatpush1.bf16.msra.mxu0 %v1536
      %1560 = vmatprep.subr.bf16.mxu0 0
      %1561 = vmatpush1.bf16.msra.mxu0 %v1537
      %1562 = vmatprep.subr.bf16.mxu0 0
      %1563 = vmatpush1.bf16.msra.mxu0 0
      %1564 = vmatprep.subr.bf16.mxu0 0
      %1565 = vmatpush1.bf16.msra.mxu0 0
      %1566 = vmatprep.subr.bf16.mxu0 0
      %1567 = vmatpush1.bf16.msra.mxu0 0
      %1568 = vmatprep.subr.bf16.mxu0 0
      %1569 = vmatpush1.bf16.msra.mxu0 0
      %1570 = vmatprep.subr.bf16.mxu0 0
      %1571 = vmatpush1.bf16.msra.mxu0 0
      %1572 = vmatprep.subr.bf16.mxu0 0
      %1573 = vmatpush1.bf16.msra.mxu0 0
      %1574 = vmatprep.subr.bf16.mxu0 0
      %1575 = vmatpush1.bf16.msra.mxu0 0
      %1576 = vmatprep.subr.bf16.mxu0 0
      %1577 = vmatpush1.bf16.msra.mxu0 0
      %1578 = vmatprep.mubr.bf16.mxu0 0
      %1579 = vmatmul.mubr.bf16.gmra.mrb[0].mxu0 %v1474
      %v1580 = vpop.f32.mrb[0].mxu0
      %v1581 = vadd.f32 %v1496, %v1580
      %v1582 = vpop.f32.mrb[0].mxu0
      %v1583 = vpop.f32.mrb[0].mxu0
      %v1584 = vpop.f32.mrb[0].mxu0
      %1585 = vdwg.mxu0
      %v1586 = vpack.c.bf16 %v1581, %v1581
      %v1587 = vld [vmem:[#allocation7] sm:$0xf]
      %v1588 = vld [vmem:[#allocation7 + $0x4] sm:$0xf]
      %v1589 = vld [vmem:[#allocation7 + $0x8] sm:$0xf]
      %v1590 = vld [vmem:[#allocation7 + $0xc] sm:$0xf]
      %v1591 = vld [vmem:[#allocation7 + $0x10] sm:$0xf]
      %v1592 = vld [vmem:[#allocation7 + $0x14] sm:$0xf]
      %v1593 = vld [vmem:[#allocation7 + $0x18] sm:$0xf]
      %v1594 = vld [vmem:[#allocation7 + $0x1c] sm:$0xf]
      %v1595 = vld [vmem:[#allocation7 + $0x20] sm:$0xf]
      %v1596 = vld [vmem:[#allocation7 + $0x24] sm:$0xf]
      %v1597 = vld [vmem:[#allocation7 + $0x28] sm:$0xf]
      %v1598 = vld [vmem:[#allocation7 + $0x2c] sm:$0xf]
      %v1599 = vld [vmem:[#allocation7 + $0x30] sm:$0xf]
      %v1600 = vld [vmem:[#allocation7 + $0x34] sm:$0xf]
      %v1601 = vld [vmem:[#allocation7 + $0x38] sm:$0xf]
      %v1602 = vld [vmem:[#allocation7 + $0x3c] sm:$0xf]
      %v1603 = vld [vmem:[%s11] sm:$0x1]
      %v1605 = vlaneseq
      %v1606 = vshrl.u32 %v1605, 7
      %v1607 = vsub.s32 0, %v1606
      %v1608 = vrot.slane %v1603, %v1607
      %v1626 = vunpack.c.l.b16 %v1587
      %v1627 = vunpack.c.l.b16 %v1588
      %v1628 = vunpack.c.l.b16 %v1589
      %v1629 = vunpack.c.l.b16 %v1590
      %v1630 = vunpack.c.l.b16 %v1591
      %v1631 = vunpack.c.l.b16 %v1592
      %v1632 = vunpack.c.l.b16 %v1593
      %v1633 = vunpack.c.l.b16 %v1594
      %v1634 = vunpack.c.l.b16 %v1595
      %v1635 = vunpack.c.l.b16 %v1596
      %v1636 = vunpack.c.l.b16 %v1597
      %v1637 = vunpack.c.l.b16 %v1598
      %v1638 = vunpack.c.l.b16 %v1599
      %v1639 = vunpack.c.l.b16 %v1600
      %v1640 = vunpack.c.l.b16 %v1601
      %v1641 = vunpack.c.l.b16 %v1602
      %v1642 = vpack.c.b16 %v1627, %v1626
      %v1643 = vpack.c.b16 %v1629, %v1628
      %v1644 = vpack.c.b16 %v1631, %v1630
      %v1645 = vpack.c.b16 %v1633, %v1632
      %v1646 = vpack.c.b16 %v1635, %v1634
      %v1647 = vpack.c.b16 %v1637, %v1636
      %v1648 = vpack.c.b16 %v1639, %v1638
      %v1649 = vpack.c.b16 %v1641, %v1640
      %1658 = vmatprep.subr.bf16.mxu0 0
      %1659 = vmatpush1.bf16.msra.mxu0 %v1642
      %1660 = vmatprep.subr.bf16.mxu0 0
      %1661 = vmatpush1.bf16.msra.mxu0 %v1643
      %1662 = vmatprep.subr.bf16.mxu0 0
      %1663 = vmatpush1.bf16.msra.mxu0 %v1644
      %1664 = vmatprep.subr.bf16.mxu0 0
      %1665 = vmatpush1.bf16.msra.mxu0 %v1645
      %1666 = vmatprep.subr.bf16.mxu0 0
      %1667 = vmatpush1.bf16.msra.mxu0 %v1646
      %1668 = vmatprep.subr.bf16.mxu0 0
      %1669 = vmatpush1.bf16.msra.mxu0 %v1647
      %1670 = vmatprep.subr.bf16.mxu0 0
      %1671 = vmatpush1.bf16.msra.mxu0 %v1648
      %1672 = vmatprep.subr.bf16.mxu0 0
      %1673 = vmatpush1.bf16.msra.mxu0 %v1649
      %1674 = vmatprep.subr.bf16.mxu0 0
      %1675 = vmatpush1.bf16.msra.mxu0 0
      %1676 = vmatprep.subr.bf16.mxu0 0
      %1677 = vmatpush1.bf16.msra.mxu0 0
      %1678 = vmatprep.subr.bf16.mxu0 0
      %1679 = vmatpush1.bf16.msra.mxu0 0
      %1680 = vmatprep.subr.bf16.mxu0 0
      %1681 = vmatpush1.bf16.msra.mxu0 0
      %1682 = vmatprep.subr.bf16.mxu0 0
      %1683 = vmatpush1.bf16.msra.mxu0 0
      %1684 = vmatprep.subr.bf16.mxu0 0
      %1685 = vmatpush1.bf16.msra.mxu0 0
      %1686 = vmatprep.subr.bf16.mxu0 0
      %1687 = vmatpush1.bf16.msra.mxu0 0
      %1688 = vmatprep.subr.bf16.mxu0 0
      %1689 = vmatpush1.bf16.msra.mxu0 0
      %1690 = vmatprep.mubr.bf16.mxu0 0
      %1691 = vmatmul.mubr.bf16.gmra.mrb[0].mxu0 %v1586
      %v1692 = vpop.f32.mrb[0].mxu0
      %v1693 = vadd.f32 %v1608, %v1692
      %v1694 = vpop.f32.mrb[0].mxu0
      %v1695 = vpop.f32.mrb[0].mxu0
      %v1696 = vpop.f32.mrb[0].mxu0
      %1697 = vdwg.mxu0
      %v1698 = vld [vmem:[%s1] sm:$0xf]
      %v1699 = vunpack.c.l.bf16 %v1698
      %v1700 = vadd.f32 %v1699, %v1693
      %1701 = vadd.xlane.f32.xlu0 %v1700
      %v1702 = vpop.xlane.xlu0 %1701
      %v1703 = vmul.f32 %v1702, 0.03125
      %v1704 = vmul.f32 %v1700, %v1700
      %1705 = vadd.xlane.f32.xlu0 %v1704
      %v1706 = vpop.xlane.xlu0 %1705
      %v1707 = vmul.f32 %v1706, 0.03125
      %v1708 = vmul.f32 %v1703, %v1703
      %v1709 = vsub.f32 %v1707, %v1708
      %v1710 = vsub.f32 %v1700, %v1703
      %v1711 = vadd.f32 %v1709, 1e-05
      %v1712 = vrsqrt.pop %v1711
      %v1713 = vmul.f32 %v1710, %v1712
      %v1714 = vld [vmem:[%s12] sm:$0x1]
      %v1716 = vlaneseq
      %v1717 = vshrl.u32 %v1716, 7
      %v1718 = vsub.s32 0, %v1717
      %v1719 = vrot.slane %v1714, %v1718
      %v1721 = vmul.f32 %v1713, %v1719
      %v1722 = vld [vmem:[%s13] sm:$0x1]
      %v1724 = vlaneseq
      %v1725 = vshrl.u32 %v1724, 7
      %v1726 = vsub.s32 0, %v1725
      %v1727 = vrot.slane %v1722, %v1726
      %v1729 = vadd.f32 %v1721, %v1727
      %v1730 = vpack.c.bf16 %v1729, %v1729
      %v1731 = vld [vmem:[#allocation9] sm:$0xf]
      %v1732 = vld [vmem:[#allocation9 + $0x4] sm:$0xf]
      %v1733 = vld [vmem:[#allocation9 + $0x8] sm:$0xf]
      %v1734 = vld [vmem:[#allocation9 + $0xc] sm:$0xf]
      %v1735 = vld [vmem:[#allocation9 + $0x10] sm:$0xf]
      %v1736 = vld [vmem:[#allocation9 + $0x14] sm:$0xf]
      %v1737 = vld [vmem:[#allocation9 + $0x18] sm:$0xf]
      %v1738 = vld [vmem:[#allocation9 + $0x1c] sm:$0xf]
      %v1739 = vld [vmem:[#allocation9 + $0x20] sm:$0xf]
      %v1740 = vld [vmem:[#allocation9 + $0x24] sm:$0xf]
      %v1741 = vld [vmem:[#allocation9 + $0x28] sm:$0xf]
      %v1742 = vld [vmem:[#allocation9 + $0x2c] sm:$0xf]
      %v1743 = vld [vmem:[#allocation9 + $0x30] sm:$0xf]
      %v1744 = vld [vmem:[#allocation9 + $0x34] sm:$0xf]
      %v1745 = vld [vmem:[#allocation9 + $0x38] sm:$0xf]
      %v1746 = vld [vmem:[#allocation9 + $0x3c] sm:$0xf]
      %v1747 = vld [vmem:[%s15] sm:$0x1]
      %v1749 = vlaneseq
      %v1750 = vshrl.u32 %v1749, 7
      %v1751 = vsub.s32 0, %v1750
      %v1752 = vrot.slane %v1747, %v1751
      %v1770 = vunpack.c.l.b16 %v1731
      %v1771 = vunpack.c.l.b16 %v1732
      %v1772 = vunpack.c.l.b16 %v1733
      %v1773 = vunpack.c.l.b16 %v1734
      %v1774 = vunpack.c.l.b16 %v1735
      %v1775 = vunpack.c.l.b16 %v1736
      %v1776 = vunpack.c.l.b16 %v1737
      %v1777 = vunpack.c.l.b16 %v1738
      %v1778 = vunpack.c.l.b16 %v1739
      %v1779 = vunpack.c.l.b16 %v1740
      %v1780 = vunpack.c.l.b16 %v1741
      %v1781 = vunpack.c.l.b16 %v1742
      %v1782 = vunpack.c.l.b16 %v1743
      %v1783 = vunpack.c.l.b16 %v1744
      %v1784 = vunpack.c.l.b16 %v1745
      %v1785 = vunpack.c.l.b16 %v1746
      %v1786 = vpack.c.b16 %v1771, %v1770
      %v1787 = vpack.c.b16 %v1773, %v1772
      %v1788 = vpack.c.b16 %v1775, %v1774
      %v1789 = vpack.c.b16 %v1777, %v1776
      %v1790 = vpack.c.b16 %v1779, %v1778
      %v1791 = vpack.c.b16 %v1781, %v1780
      %v1792 = vpack.c.b16 %v1783, %v1782
      %v1793 = vpack.c.b16 %v1785, %v1784
      %1802 = vmatprep.subr.bf16.mxu0 0
      %1803 = vmatpush1.bf16.msra.mxu0 %v1786
      %1804 = vmatprep.subr.bf16.mxu0 0
      %1805 = vmatpush1.bf16.msra.mxu0 %v1787
      %1806 = vmatprep.subr.bf16.mxu0 0
      %1807 = vmatpush1.bf16.msra.mxu0 %v1788
      %1808 = vmatprep.subr.bf16.mxu0 0
      %1809 = vmatpush1.bf16.msra.mxu0 %v1789
      %1810 = vmatprep.subr.bf16.mxu0 0
      %1811 = vmatpush1.bf16.msra.mxu0 %v1790
      %1812 = vmatprep.subr.bf16.mxu0 0
      %1813 = vmatpush1.bf16.msra.mxu0 %v1791
      %1814 = vmatprep.subr.bf16.mxu0 0
      %1815 = vmatpush1.bf16.msra.mxu0 %v1792
      %1816 = vmatprep.subr.bf16.mxu0 0
      %1817 = vmatpush1.bf16.msra.mxu0 %v1793
      %1818 = vmatprep.subr.bf16.mxu0 0
      %1819 = vmatpush1.bf16.msra.mxu0 0
      %1820 = vmatprep.subr.bf16.mxu0 0
      %1821 = vmatpush1.bf16.msra.mxu0 0
      %1822 = vmatprep.subr.bf16.mxu0 0
      %1823 = vmatpush1.bf16.msra.mxu0 0
      %1824 = vmatprep.subr.bf16.mxu0 0
      %1825 = vmatpush1.bf16.msra.mxu0 0
      %1826 = vmatprep.subr.bf16.mxu0 0
      %1827 = vmatpush1.bf16.msra.mxu0 0
      %1828 = vmatprep.subr.bf16.mxu0 0
      %1829 = vmatpush1.bf16.msra.mxu0 0
      %1830 = vmatprep.subr.bf16.mxu0 0
      %1831 = vmatpush1.bf16.msra.mxu0 0
      %1832 = vmatprep.subr.bf16.mxu0 0
      %1833 = vmatpush1.bf16.msra.mxu0 0
      %1834 = vmatprep.mubr.bf16.mxu0 0
      %1835 = vmatmul.mubr.bf16.gmra.mrb[0].mxu0 %v1730
      %v1836 = vpop.f32.mrb[0].mxu0
      %v1837 = vadd.f32 %v1752, %v1836
      %v1838 = vpop.f32.mrb[0].mxu0
      %v1839 = vpop.f32.mrb[0].mxu0
      %v1840 = vpop.f32.mrb[0].mxu0
      %1841 = vdwg.mxu0
      %v1842 = vmul.f32 %v1837, %v1837
      %v1843 = vmul.f32 %v1837, %v1842
      %v1844 = vmul.f32 %v1843, 0.044715
      %v1845 = vadd.f32 %v1837, %v1844
      %v1846 = vmul.f32 %v1845, 0.7978846
      %v1847 = vtanh.pop %v1846
      %v1848 = vadd.f32 %v1847, 1.0
      %v1849 = vmul.f32 %v1848, 0.5
      %v1850 = vmul.f32 %v1837, %v1849
      %v1851 = vpack.c.bf16 %v1850, %v1850
      %v1852 = vld [vmem:[#allocation11] sm:$0xf]
      %v1853 = vld [vmem:[#allocation11 + $0x4] sm:$0xf]
      %v1854 = vld [vmem:[#allocation11 + $0x8] sm:$0xf]
      %v1855 = vld [vmem:[#allocation11 + $0xc] sm:$0xf]
      %v1856 = vld [vmem:[#allocation11 + $0x10] sm:$0xf]
      %v1857 = vld [vmem:[#allocation11 + $0x14] sm:$0xf]
      %v1858 = vld [vmem:[#allocation11 + $0x18] sm:$0xf]
      %v1859 = vld [vmem:[#allocation11 + $0x1c] sm:$0xf]
      %v1860 = vld [vmem:[#allocation11 + $0x20] sm:$0xf]
      %v1861 = vld [vmem:[#allocation11 + $0x24] sm:$0xf]
      %v1862 = vld [vmem:[#allocation11 + $0x28] sm:$0xf]
      %v1863 = vld [vmem:[#allocation11 + $0x2c] sm:$0xf]
      %v1864 = vld [vmem:[#allocation11 + $0x30] sm:$0xf]
      %v1865 = vld [vmem:[#allocation11 + $0x34] sm:$0xf]
      %v1866 = vld [vmem:[#allocation11 + $0x38] sm:$0xf]
      %v1867 = vld [vmem:[#allocation11 + $0x3c] sm:$0xf]
      %v1868 = vld [vmem:[%s17] sm:$0x1]
      %v1870 = vlaneseq
      %v1871 = vshrl.u32 %v1870, 7
      %v1872 = vsub.s32 0, %v1871
      %v1873 = vrot.slane %v1868, %v1872
      %v1891 = vunpack.c.l.b16 %v1852
      %v1892 = vunpack.c.l.b16 %v1853
      %v1893 = vunpack.c.l.b16 %v1854
      %v1894 = vunpack.c.l.b16 %v1855
      %v1895 = vunpack.c.l.b16 %v1856
      %v1896 = vunpack.c.l.b16 %v1857
      %v1897 = vunpack.c.l.b16 %v1858
      %v1898 = vunpack.c.l.b16 %v1859
      %v1899 = vunpack.c.l.b16 %v1860
      %v1900 = vunpack.c.l.b16 %v1861
      %v1901 = vunpack.c.l.b16 %v1862
      %v1902 = vunpack.c.l.b16 %v1863
      %v1903 = vunpack.c.l.b16 %v1864
      %v1904 = vunpack.c.l.b16 %v1865
      %v1905 = vunpack.c.l.b16 %v1866
      %v1906 = vunpack.c.l.b16 %v1867
      %v1907 = vpack.c.b16 %v1892, %v1891
      %v1908 = vpack.c.b16 %v1894, %v1893
      %v1909 = vpack.c.b16 %v1896, %v1895
      %v1910 = vpack.c.b16 %v1898, %v1897
      %v1911 = vpack.c.b16 %v1900, %v1899
      %v1912 = vpack.c.b16 %v1902, %v1901
      %v1913 = vpack.c.b16 %v1904, %v1903
      %v1914 = vpack.c.b16 %v1906, %v1905
      %1923 = vmatprep.subr.bf16.mxu0 0
      %1924 = vmatpush1.bf16.msra.mxu0 %v1907
      %1925 = vmatprep.subr.bf16.mxu0 0
      %1926 = vmatpush1.bf16.msra.mxu0 %v1908
      %1927 = vmatprep.subr.bf16.mxu0 0
      %1928 = vmatpush1.bf16.msra.mxu0 %v1909
      %1929 = vmatprep.subr.bf16.mxu0 0
      %1930 = vmatpush1.bf16.msra.mxu0 %v1910
      %1931 = vmatprep.subr.bf16.mxu0 0
      %1932 = vmatpush1.bf16.msra.mxu0 %v1911
      %1933 = vmatprep.subr.bf16.mxu0 0
      %1934 = vmatpush1.bf16.msra.mxu0 %v1912
      %1935 = vmatprep.subr.bf16.mxu0 0
      %1936 = vmatpush1.bf16.msra.mxu0 %v1913
      %1937 = vmatprep.subr.bf16.mxu0 0
      %1938 = vmatpush1.bf16.msra.mxu0 %v1914
      %1939 = vmatprep.subr.bf16.mxu0 0
      %1940 = vmatpush1.bf16.msra.mxu0 0
      %1941 = vmatprep.subr.bf16.mxu0 0
      %1942 = vmatpush1.bf16.msra.mxu0 0
      %1943 = vmatprep.subr.bf16.mxu0 0
      %1944 = vmatpush1.bf16.msra.mxu0 0
      %1945 = vmatprep.subr.bf16.mxu0 0
      %1946 = vmatpush1.bf16.msra.mxu0 0
      %1947 = vmatprep.subr.bf16.mxu0 0
      %1948 = vmatpush1.bf16.msra.mxu0 0
      %1949 = vmatprep.subr.bf16.mxu0 0
      %1950 = vmatpush1.bf16.msra.mxu0 0
      %1951 = vmatprep.subr.bf16.mxu0 0
      %1952 = vmatpush1.bf16.msra.mxu0 0
      %1953 = vmatprep.subr.bf16.mxu0 0
      %1954 = vmatpush1.bf16.msra.mxu0 0
      %1955 = vmatprep.mubr.bf16.mxu0 0
      %1956 = vmatmul.mubr.bf16.gmra.mrb[0].mxu0 %v1851
      %v1957 = vpop.f32.mrb[0].mxu0
      %v1958 = vadd.f32 %v1873, %v1957
      %v1959 = vpop.f32.mrb[0].mxu0
      %v1960 = vpop.f32.mrb[0].mxu0
      %v1961 = vpop.f32.mrb[0].mxu0
      %1962 = vdwg.mxu0
      %v1963 = vadd.f32 %v1700, %v1958
      %v1964 = vld [vmem:[%s18] sm:$0x1]
      %v1966 = vlaneseq
      %v1967 = vshrl.u32 %v1966, 7
      %v1968 = vsub.s32 0, %v1967
      %v1969 = vrot.slane %v1964, %v1968
      %v1971 = vmul.f32 %v1963, %v1969
      %1972 = vadd.xlane.f32.xlu0 %v1971
      %v1973 = vpop.xlane.xlu0 %1972
      %v1974 = vld [vmem:[#allocation6] sm:$0x1]
      %v1976 = vlaneseq
      %v1977 = vshrl.u32 %v1976, 7
      %v1978 = vsub.s32 0, %v1977
      %v1979 = vrot.slane %v1974, %v1978
      %v1981 = vadd.f32 %v1973, %v1979
      %1982 = vst.msk [vmem:[%s20] sm:$0xff] %vm984, %v1981
    $region101: #{reasoning_reward_forward.1} parent=1 // pred_fallthru
      _
    // Predicated region
    $region102: #{reasoning_reward_forward.1} parent=1 // pred_check
      _
    $region103: #{reasoning_reward_forward.1} parent=1 // pred_check_branch
      %1984 = sbr.rel (0) target = $region105
    $region104: #{reasoning_reward_forward.1} parent=1 // pred_region
      _
    $region105: #{reasoning_reward_forward.1} parent=1 // pred_fallthru
      _
    // Predicated region
    $region106: #{reasoning_reward_forward.1} parent=1 // pred_check
      _
    $region107: #{reasoning_reward_forward.1} parent=1 // pred_check_branch
      %1986 = sbr.rel (0) target = $region109
    $region108: #{reasoning_reward_forward.1} parent=1 // pred_region
      _
    $region109: #{reasoning_reward_forward.1} parent=1 // pred_fallthru
      _
    %1987 = vsyncpa [#allocation8], 1
    %1988 = vsyncpa [#allocation10], 1

</llo_original>
